<compile_context>
chip_gen: v5e
topology: v5e:2x2
jax: 0.10.0
libtpu: 0.0.40
codegen_flags: <defaults>
</compile_context>

<pallas_src>
import functools

import jax
import jax.numpy as jnp
from jax.experimental import pallas as pl
from jax.experimental.pallas import tpu as pltpu

BN_EPS = 1e-5


def _conv_tile(xa_ref, xb_ref, w_ref, *, tm, w_img, pow2):
    """One transposed-conv tile: returns z of shape (Cn, TM) in f32.

    xa_ref : (Cin, TM) bf16  flat activations for positions [m*TM, (m+1)*TM)
    xb_ref : (Cin, TM) bf16  flat activations for positions [(m+1)*TM, (m+2)*TM)
    w_ref  : (4, Cn, Cin) bf16  per-tap folded weights (Cn = 4*Cout, phase-major rows)
    """
    cur = xa_ref[...]
    nxt = xb_ref[...]
    cin = cur.shape[0]
    full = jnp.concatenate([cur, nxt], axis=1)                 # (Cin, 2*TM)

    # Taps with a column shift (dc=1) must see the right-edge zero padding at c == W-1 instead
    # of wrapping into the first pixel of the next row.  Bottom edge (dr=1, r == H-1) needs no
    # mask: those flat positions land in the zero-padded tail of the array.
    lane = jax.lax.broadcasted_iota(jnp.int32, (1, tm), 1)
    pos = lane + pl.program_id(1) * tm
    col = jnp.bitwise_and(pos, w_img - 1) if pow2 else pos % w_img
    col_ok = col != (w_img - 1)

    def tap(shift, mask_col):
        t = jax.lax.slice(full, (0, shift), (cin, shift + tm))  # static lane-offset window
        if mask_col:
            t = jnp.where(col_ok, t, jnp.zeros_like(t))
        return t

    t00 = cur                       # (dr=0, dc=0)
    t01 = tap(1, True)              # (dr=0, dc=1)
    t10 = tap(w_img, False)         # (dr=1, dc=0)
    t11 = tap(w_img + 1, True)      # (dr=1, dc=1)

    z = jnp.dot(w_ref[0], t00, preferred_element_type=jnp.float32)
    z = z + jnp.dot(w_ref[1], t01, preferred_element_type=jnp.float32)
    z = z + jnp.dot(w_ref[2], t10, preferred_element_type=jnp.float32)
    z = z + jnp.dot(w_ref[3], t11, preferred_element_type=jnp.float32)
    return z


def _stats_kernel(xa_ref, xb_ref, w_ref, sum_ref, sq_ref, *, tm, w_img, pow2):
    # Pass 1: conv tile -> per-(batch, tile, phase-channel) partial sum / sum-of-squares.
    # Zero-padded spatial columns produce z == 0 exactly (no bias), so no masking is needed.
    z = _conv_tile(xa_ref, xb_ref, w_ref, tm=tm, w_img=w_img, pow2=pow2)
    sum_ref[...] = jnp.sum(z, axis=1, keepdims=True)
    sq_ref[...] = jnp.sum(z * z, axis=1, keepdims=True)


def _apply_kernel(xa_ref, xb_ref, w_ref, ss_ref, o_ref, *, tm, w_img, pow2):
    # Pass 2: recompute the conv tile, apply fused BN affine + ReLU, store bf16 lane-dense.
    z = _conv_tile(xa_ref, xb_ref, w_ref, tm=tm, w_img=w_img, pow2=pow2)
    y = z * ss_ref[0] + ss_ref[1]                              # (Cn, TM) * (Cn, 1) + (Cn, 1)
    o_ref[...] = jnp.maximum(y, 0.0).astype(o_ref.dtype)


def decbr2d_forward(x_nchw, w_ct, bias, gamma, beta, *,
                    stride=2, padding=1, output_padding=1, eps=BN_EPS):
    """Forward pass matching DECBR2d defaults (ConvTranspose2d k=3,s=2,p=1,op=1 + BN(train) + ReLU).

    x_nchw: (N, Cin, H, W) f32 ; w_ct: (Cin, Cout, 3, 3) ; bias/gamma/beta: (Cout,)
    returns (N, Cout, 2H, 2W) f32
    """
    assert stride == 2 and padding == 1 and output_padding == 1 and w_ct.shape[2] == 3
    N, Cin, H, W = x_nchw.shape
    Cout = w_ct.shape[1]
    PH = 4                                  # 2x2 sub-pixel output phases
    Cn = PH * Cout                          # phase-major output channels
    HW = H * W

    # ConvTranspose bias followed by train-mode BatchNorm is a no-op (mean cancels it exactly).
    del bias

    # ---- spatial tile size (lane dim = flattened H*W), adapted to channel count -------------
    TM = 512
    while TM > 128 and (2 * Cin + Cn) * TM * 2 * 2 > 8 * 2**20:   # keep dbl-buffered tiles small
        TM //= 2
    TM = min(TM, pl.cdiv(HW, 128) * 128)
    TM = max(TM, 128, pl.cdiv(W + 1, 128) * 128)                  # halo (W+1) must fit in a tile
    HWp = pl.cdiv(HW, TM) * TM
    nM = HWp // TM

    # ---- activations: flatten + extra zero tile so the "next tile" input is always in range --
    x_flat = jnp.pad(x_nchw.astype(jnp.bfloat16).reshape(N, Cin, HW),
                     ((0, 0), (0, 0), (0, HWp + TM - HW)))

    # ---- per-tap folded weights: (4 taps, 4*Cout phase-major rows, Cin) ----------------------
    # out[n, co, 2r+ph, 2c+pw] = sum_{dr,dc,ci} x[n, ci, r+dr, c+dc] * w_ct[ci, co, kh, kw]
    # with kh = 1 if ph==0 else (2 if dr==0 else 0), kw analogously; invalid combos stay zero.
    w_tap = jnp.zeros((PH, Cn, Cin), jnp.float32)
    for dr in (0, 1):
        for dc in (0, 1):
            t = dr * 2 + dc
            for ph in (0, 1):
                for pw in (0, 1):
                    if (ph == 0 and dr == 1) or (pw == 0 and dc == 1):
                        continue
                    kh = 1 if ph == 0 else (2 if dr == 0 else 0)
                    kw = 1 if pw == 0 else (2 if dc == 0 else 0)
                    phase = ph * 2 + pw
                    w_tap = w_tap.at[t, phase * Cout:(phase + 1) * Cout, :].set(
                        w_ct[:, :, kh, kw].T)
    w_tap = w_tap.astype(jnp.bfloat16)

    pow2 = (W & (W - 1)) == 0
    statics = dict(tm=TM, w_img=W, pow2=pow2)

    x_spec_cur = pl.BlockSpec((pl.Squeezed(), Cin, TM), lambda n, m: (n, 0, m))
    x_spec_nxt = pl.BlockSpec((pl.Squeezed(), Cin, TM), lambda n, m: (n, 0, m + 1))
    w_spec = pl.BlockSpec((PH, Cn, Cin), lambda n, m: (0, 0, 0))
    stat_spec = pl.BlockSpec((pl.Squeezed(), pl.Squeezed(), Cn, 1), lambda n, m: (n, m, 0, 0))

    est = 2 * (2 * Cin * TM * 2 + PH * Cn * Cin * 2 + Cn * TM * 2 + 2 * Cn * 128 * 4)
    cparams = pltpu.CompilerParams(
        dimension_semantics=("parallel", "parallel"),
        vmem_limit_bytes=int(min(64 * 2**20, max(32 * 2**20, 2 * est))))

    # ---- pass 1: per-(batch, tile) partial BatchNorm statistics ------------------------------
    psum, psq = pl.pallas_call(
        functools.partial(_stats_kernel, **statics),
        out_shape=(jax.ShapeDtypeStruct((N, nM, Cn, 1), jnp.float32),
                   jax.ShapeDtypeStruct((N, nM, Cn, 1), jnp.float32)),
        grid_spec=pltpu.PrefetchScalarGridSpec(
            num_scalar_prefetch=0, grid=(N, nM),
            in_specs=[x_spec_cur, x_spec_nxt, w_spec],
            out_specs=[stat_spec, stat_spec]),
        compiler_params=cparams,
    )(x_flat, x_flat, w_tap)

    # ---- BN finalize in plain JAX (tiny): global train-mode stats -> fused scale/shift -------
    count = float(N * PH * HW)                                    # = N * Ho * Wo per channel
    tot_s = jnp.sum(psum, axis=(0, 1, 3)).reshape(PH, Cout).sum(axis=0)
    tot_q = jnp.sum(psq, axis=(0, 1, 3)).reshape(PH, Cout).sum(axis=0)
    mean = tot_s / count
    var = jnp.maximum(tot_q / count - mean * mean, 0.0)           # clamp single-pass variance
    inv = jax.lax.rsqrt(var + eps)
    scale_c = gamma.astype(jnp.float32) * inv
    shift_c = beta.astype(jnp.float32) - mean * scale_c
    ss = jnp.stack([jnp.tile(scale_c, PH), jnp.tile(shift_c, PH)],
                   axis=0)[:, :, None].astype(jnp.float32)        # (2, Cn, 1)

    # ---- pass 2: recompute conv, apply BN affine + ReLU, bf16 lane-dense store ---------------
    out = pl.pallas_call(
        functools.partial(_apply_kernel, **statics),
        out_shape=jax.ShapeDtypeStruct((N, Cn, HWp), jnp.bfloat16),
        grid_spec=pltpu.PrefetchScalarGridSpec(
            num_scalar_prefetch=0, grid=(N, nM),
            in_specs=[x_spec_cur, x_spec_nxt, w_spec,
                      pl.BlockSpec((2, Cn, 1), lambda n, m: (0, 0, 0))],
            out_specs=pl.BlockSpec((pl.Squeezed(), Cn, TM), lambda n, m: (n, 0, m))),
        compiler_params=cparams,
    )(x_flat, x_flat, w_tap, ss)

    # ---- unscramble sub-pixel phases (bf16): (N, [ph, pw, co], H*W) -> (N, Cout, 2H, 2W) -----
    out = out[:, :, :HW].reshape(N, 2, 2, Cout, H, W)
    out = jnp.transpose(out, (0, 3, 4, 1, 5, 2)).reshape(N, Cout, 2 * H, 2 * W)
    return out.astype(jnp.float32)


def _reference(x_nchw, w_ct, bias, gamma, beta, *,
               stride=2, padding=1, output_padding=1):
    """Pure-JAX reference of the same math (XLA conv path), for verification."""
    K = w_ct.shape[2]
    lo = K - 1 - padding
    hi = K - 1 - padding + output_padding
    w_oihw = jnp.transpose(jnp.flip(w_ct, axis=(2, 3)), (1, 0, 2, 3))
    y = jax.lax.conv_general_dilated(
        x_nchw, w_oihw, window_strides=(1, 1),
        padding=[(lo, hi), (lo, hi)], lhs_dilation=(stride, stride),
        dimension_numbers=('NCHW', 'OIHW', 'NCHW'))
    y = y + bias[None, :, None, None]
    mean = jnp.mean(y, axis=(0, 2, 3), keepdims=True)
    var = jnp.mean((y - mean) ** 2, axis=(0, 2, 3), keepdims=True)
    y = (y - mean) * jax.lax.rsqrt(var + BN_EPS)
    y = y * gamma[None, :, None, None] + beta[None, :, None, None]
    return jnp.maximum(y, 0.0)


if __name__ == "__main__":
    key = jax.random.PRNGKey(0)
    k_x, k_w, k_b, k_g, k_bt = jax.random.split(key, 5)

    N, Cin, Cout, H, W, K = 2, 4, 8, 16, 16, 3

    x = jax.random.normal(k_x, (N, Cin, H, W), jnp.float32)
    fan_in = Cout * K * K
    bound = 1.0 / (fan_in ** 0.5)
    w_ct = jax.random.uniform(k_w, (Cin, Cout, K, K), jnp.float32, -bound, bound)
    bias = jax.random.uniform(k_b, (Cout,), jnp.float32, -bound, bound)
    gamma = jax.random.uniform(k_g, (Cout,), jnp.float32, 0.5, 1.5)
    beta = jax.random.uniform(k_bt, (Cout,), jnp.float32, -0.5, 0.5)

    fwd = jax.jit(decbr2d_forward)
    out = jax.block_until_ready(fwd(x, w_ct, bias, gamma, beta))
    assert out.shape == (N, Cout, 2 * H, 2 * W), out.shape

    # Tight check: reference fed the same bf16-rounded activations/weights (the kernel's MXU
    # inputs are bf16 with f32 accumulation, output stored in bf16).  Also validates that the
    # dropped conv bias is indeed cancelled by train-mode BatchNorm.
    xq = x.astype(jnp.bfloat16).astype(jnp.float32)
    wq = w_ct.astype(jnp.bfloat16).astype(jnp.float32)
    ref_q = jax.block_until_ready(_reference(xq, wq, bias, gamma, beta))
    assert jnp.allclose(out, ref_q, atol=3e-2, rtol=3e-2), \
        float(jnp.max(jnp.abs(out - ref_q)))

    # Loose check against full-f32 module semantics (bf16 input/output quantization only).
    ref = jax.block_until_ready(_reference(x, w_ct, bias, gamma, beta))
    assert jnp.allclose(out, ref, atol=6e-2, rtol=6e-2), \
        float(jnp.max(jnp.abs(out - ref)))

    print("KERNEL_OK")
</pallas_src>

<mosaic_0001>
module attributes {stable_mosaic.version = 11 : i64} {
  func.func @_stats_kernel(%arg0: i32, %arg1: i32, %arg2: memref<1x4x256xbf16, #tpu.memory_space<vmem>>, %arg3: memref<1x4x256xbf16, #tpu.memory_space<vmem>>, %arg4: memref<4x32x4xbf16, #tpu.memory_space<vmem>>, %arg5: memref<1x1x32x1xf32, #tpu.memory_space<vmem>>, %arg6: memref<1x1x32x1xf32, #tpu.memory_space<vmem>>) attributes {dimension_semantics = [#tpu.dimension_semantics<parallel>, #tpu.dimension_semantics<parallel>], iteration_bounds = array<i64: 2, 1>, scalar_prefetch = 0 : i64, scratch_operands = 0 : i64, tpu.core_type = #tpu.core_type<tc>, window_params = [{transform_indices = @transform_0, window_bounds = array<i64: 1, 4, 256>}, {transform_indices = @transform_1, window_bounds = array<i64: 1, 4, 256>}, {pipeline_mode = #tpu.pipeline_mode<synchronous>, transform_indices = @transform_2, window_bounds = array<i64: 4, 32, 4>}, {transform_indices = @transform_3, window_bounds = array<i64: 1, 1, 32, 1>}, {transform_indices = @transform_4, window_bounds = array<i64: 1, 1, 32, 1>}]} {
    %c0 = arith.constant 0 : index
    %c0_0 = arith.constant 0 : index
    %c0_1 = arith.constant 0 : index
    %0 = vector.load %arg2[%c0, %c0_0, %c0_1] : memref<1x4x256xbf16, #tpu.memory_space<vmem>>, vector<1x4x256xbf16>
    %1 = vector.shape_cast %0 : vector<1x4x256xbf16> to vector<4x256xbf16>
    %c0_2 = arith.constant 0 : index
    %c0_3 = arith.constant 0 : index
    %c0_4 = arith.constant 0 : index
    %2 = vector.load %arg3[%c0_2, %c0_3, %c0_4] : memref<1x4x256xbf16, #tpu.memory_space<vmem>>, vector<1x4x256xbf16>
    %3 = vector.shape_cast %2 : vector<1x4x256xbf16> to vector<4x256xbf16>
    %4 = tpu.concatenate %1, %3 in 1 : vector<4x256xbf16>, vector<4x256xbf16> -> vector<4x512xbf16>
    %5 = tpu.iota {dimensions = array<i32: 1>} : vector<1x256xi32>
    %c256_i32 = arith.constant 256 : i32
    %6 = arith.muli %arg1, %c256_i32 : i32
    %7 = vector.broadcast %6 : i32 to vector<1x256xi32>
    %8 = arith.addi %5, %7 : vector<1x256xi32>
    %c15_i32 = arith.constant 15 : i32
    %9 = vector.broadcast %c15_i32 : i32 to vector<1x256xi32>
    %10 = arith.andi %8, %9 : vector<1x256xi32>
    %c15_i32_5 = arith.constant 15 : i32
    %11 = vector.broadcast %c15_i32_5 : i32 to vector<1x256xi32>
    %12 = arith.cmpi ne, %10, %11 : vector<1x256xi32>
    %13 = vector.extract_strided_slice %4 {offsets = [0, 1], sizes = [4, 256], strides = [1, 1]} : vector<4x512xbf16> to vector<4x256xbf16>
    %cst = arith.constant 0.000000e+00 : bf16
    %14 = vector.broadcast %cst : bf16 to vector<4x256xbf16>
    %15 = vector.shape_cast %12 : vector<1x256xi1> to vector<1x256xi1>
    %16 = vector.broadcast %15 : vector<1x256xi1> to vector<4x256xi1>
    %17 = arith.select %16, %13, %14 : vector<4x256xi1>, vector<4x256xbf16>
    %18 = vector.extract_strided_slice %4 {offsets = [0, 16], sizes = [4, 256], strides = [1, 1]} : vector<4x512xbf16> to vector<4x256xbf16>
    %19 = vector.extract_strided_slice %4 {offsets = [0, 17], sizes = [4, 256], strides = [1, 1]} : vector<4x512xbf16> to vector<4x256xbf16>
    %cst_6 = arith.constant 0.000000e+00 : bf16
    %20 = vector.broadcast %cst_6 : bf16 to vector<4x256xbf16>
    %21 = vector.shape_cast %12 : vector<1x256xi1> to vector<1x256xi1>
    %22 = vector.broadcast %21 : vector<1x256xi1> to vector<4x256xi1>
    %23 = arith.select %22, %19, %20 : vector<4x256xi1>, vector<4x256xbf16>
    %c0_7 = arith.constant 0 : index
    %c0_8 = arith.constant 0 : index
    %c0_9 = arith.constant 0 : index
    %24 = vector.load %arg4[%c0_7, %c0_8, %c0_9] : memref<4x32x4xbf16, #tpu.memory_space<vmem>>, vector<1x32x4xbf16>
    %25 = vector.shape_cast %24 : vector<1x32x4xbf16> to vector<32x4xbf16>
    %cst_10 = arith.constant dense<0.000000e+00> : vector<32x256xf32>
    %26 = tpu.matmul %25, %1, %cst_10 {dimension_numbers = #tpu.dot_dimension_numbers<[1], [0], [0], [1], [0, 0, 1, 1], [], []>} : vector<32x4xbf16>, vector<4x256xbf16>, vector<32x256xf32> -> vector<32x256xf32>
    %c1 = arith.constant 1 : index
    %c0_11 = arith.constant 0 : index
    %c0_12 = arith.constant 0 : index
    %27 = vector.load %arg4[%c1, %c0_11, %c0_12] : memref<4x32x4xbf16, #tpu.memory_space<vmem>>, vector<1x32x4xbf16>
    %28 = vector.shape_cast %27 : vector<1x32x4xbf16> to vector<32x4xbf16>
    %cst_13 = arith.constant dense<0.000000e+00> : vector<32x256xf32>
    %29 = tpu.matmul %28, %17, %cst_13 {dimension_numbers = #tpu.dot_dimension_numbers<[1], [0], [0], [1], [0, 0, 1, 1], [], []>} : vector<32x4xbf16>, vector<4x256xbf16>, vector<32x256xf32> -> vector<32x256xf32>
    %30 = arith.addf %26, %29 : vector<32x256xf32>
    %c2 = arith.constant 2 : index
    %c0_14 = arith.constant 0 : index
    %c0_15 = arith.constant 0 : index
    %31 = vector.load %arg4[%c2, %c0_14, %c0_15] : memref<4x32x4xbf16, #tpu.memory_space<vmem>>, vector<1x32x4xbf16>
    %32 = vector.shape_cast %31 : vector<1x32x4xbf16> to vector<32x4xbf16>
    %cst_16 = arith.constant dense<0.000000e+00> : vector<32x256xf32>
    %33 = tpu.matmul %32, %18, %cst_16 {dimension_numbers = #tpu.dot_dimension_numbers<[1], [0], [0], [1], [0, 0, 1, 1], [], []>} : vector<32x4xbf16>, vector<4x256xbf16>, vector<32x256xf32> -> vector<32x256xf32>
    %34 = arith.addf %30, %33 : vector<32x256xf32>
    %c3 = arith.constant 3 : index
    %c0_17 = arith.constant 0 : index
    %c0_18 = arith.constant 0 : index
    %35 = vector.load %arg4[%c3, %c0_17, %c0_18] : memref<4x32x4xbf16, #tpu.memory_space<vmem>>, vector<1x32x4xbf16>
    %36 = vector.shape_cast %35 : vector<1x32x4xbf16> to vector<32x4xbf16>
    %cst_19 = arith.constant dense<0.000000e+00> : vector<32x256xf32>
    %37 = tpu.matmul %36, %23, %cst_19 {dimension_numbers = #tpu.dot_dimension_numbers<[1], [0], [0], [1], [0, 0, 1, 1], [], []>} : vector<32x4xbf16>, vector<4x256xbf16>, vector<32x256xf32> -> vector<32x256xf32>
    %38 = arith.addf %34, %37 : vector<32x256xf32>
    %cst_20 = arith.constant dense<0.000000e+00> : vector<32xf32>
    %39 = vector.multi_reduction <add>, %38, %cst_20 [1] : vector<32x256xf32> to vector<32xf32>
    %40 = vector.shape_cast %39 : vector<32xf32> to vector<32x1xf32>
    %c0_21 = arith.constant 0 : index
    %c0_22 = arith.constant 0 : index
    %c0_23 = arith.constant 0 : index
    %c0_24 = arith.constant 0 : index
    %41 = vector.load %arg5[%c0_21, %c0_22, %c0_23, %c0_24] : memref<1x1x32x1xf32, #tpu.memory_space<vmem>>, vector<1x1x32x1xf32>
    %42 = vector.shape_cast %41 : vector<1x1x32x1xf32> to vector<32x1xf32>
    %43 = vector.shape_cast %40 : vector<32x1xf32> to vector<1x1x32x1xf32>
    tpu.vector_store %arg5[%c0_21, %c0_22, %c0_23, %c0_24], %43 {strides = array<i32>} : memref<1x1x32x1xf32, #tpu.memory_space<vmem>>, vector<1x1x32x1xf32>,
    %44 = arith.mulf %38, %38 : vector<32x256xf32>
    %cst_25 = arith.constant dense<0.000000e+00> : vector<32xf32>
    %45 = vector.multi_reduction <add>, %44, %cst_25 [1] : vector<32x256xf32> to vector<32xf32>
    %46 = vector.shape_cast %45 : vector<32xf32> to vector<32x1xf32>
    %c0_26 = arith.constant 0 : index
    %c0_27 = arith.constant 0 : index
    %c0_28 = arith.constant 0 : index
    %c0_29 = arith.constant 0 : index
    %47 = vector.load %arg6[%c0_26, %c0_27, %c0_28, %c0_29] : memref<1x1x32x1xf32, #tpu.memory_space<vmem>>, vector<1x1x32x1xf32>
    %48 = vector.shape_cast %47 : vector<1x1x32x1xf32> to vector<32x1xf32>
    %49 = vector.shape_cast %46 : vector<32x1xf32> to vector<1x1x32x1xf32>
    tpu.vector_store %arg6[%c0_26, %c0_27, %c0_28, %c0_29], %49 {strides = array<i32>} : memref<1x1x32x1xf32, #tpu.memory_space<vmem>>, vector<1x1x32x1xf32>,
    return
  }
  func.func @transform_0(%arg0: i32, %arg1: i32) -> (i32, i32, i32) {
    %c0_i32 = arith.constant 0 : i32
    %c0_i32_0 = arith.constant 0 : i32
    return %arg0, %c0_i32, %arg1 : i32, i32, i32
  }
  func.func @transform_1(%arg0: i32, %arg1: i32) -> (i32, i32, i32) {
    %c1_i32 = arith.constant 1 : i32
    %0 = arith.addi %arg1, %c1_i32 : i32
    %c0_i32 = arith.constant 0 : i32
    %c0_i32_0 = arith.constant 0 : i32
    return %arg0, %c0_i32, %0 : i32, i32, i32
  }
  func.func @transform_2(%arg0: i32, %arg1: i32) -> (i32, i32, i32) {
    %c0_i32 = arith.constant 0 : i32
    %c0_i32_0 = arith.constant 0 : i32
    %c0_i32_1 = arith.constant 0 : i32
    %c0_i32_2 = arith.constant 0 : i32
    return %c0_i32, %c0_i32_0, %c0_i32_1 : i32, i32, i32
  }
  func.func @transform_3(%arg0: i32, %arg1: i32) -> (i32, i32, i32, i32) {
    %c0_i32 = arith.constant 0 : i32
    %c0_i32_0 = arith.constant 0 : i32
    %c0_i32_1 = arith.constant 0 : i32
    return %arg0, %arg1, %c0_i32, %c0_i32_0 : i32, i32, i32, i32
  }
  func.func @transform_4(%arg0: i32, %arg1: i32) -> (i32, i32, i32, i32) {
    %c0_i32 = arith.constant 0 : i32
    %c0_i32_0 = arith.constant 0 : i32
    %c0_i32_1 = arith.constant 0 : i32
    return %arg0, %arg1, %c0_i32, %c0_i32_0 : i32, i32, i32, i32
  }
}

module attributes {stable_mosaic.version = 11 : i64} {
  func.func @_apply_kernel(%arg0: i32, %arg1: i32, %arg2: memref<1x4x256xbf16, #tpu.memory_space<vmem>>, %arg3: memref<1x4x256xbf16, #tpu.memory_space<vmem>>, %arg4: memref<4x32x4xbf16, #tpu.memory_space<vmem>>, %arg5: memref<2x32x1xf32, #tpu.memory_space<vmem>>, %arg6: memref<1x32x256xbf16, #tpu.memory_space<vmem>>) attributes {dimension_semantics = [#tpu.dimension_semantics<parallel>, #tpu.dimension_semantics<parallel>], iteration_bounds = array<i64: 2, 1>, scalar_prefetch = 0 : i64, scratch_operands = 0 : i64, tpu.core_type = #tpu.core_type<tc>, window_params = [{transform_indices = @transform_0, window_bounds = array<i64: 1, 4, 256>}, {transform_indices = @transform_1, window_bounds = array<i64: 1, 4, 256>}, {pipeline_mode = #tpu.pipeline_mode<synchronous>, transform_indices = @transform_2, window_bounds = array<i64: 4, 32, 4>}, {pipeline_mode = #tpu.pipeline_mode<synchronous>, transform_indices = @transform_3, window_bounds = array<i64: 2, 32, 1>}, {transform_indices = @transform_4, window_bounds = array<i64: 1, 32, 256>}]} {
    %c0 = arith.constant 0 : index
    %c0_0 = arith.constant 0 : index
    %c0_1 = arith.constant 0 : index
    %0 = vector.load %arg2[%c0, %c0_0, %c0_1] : memref<1x4x256xbf16, #tpu.memory_space<vmem>>, vector<1x4x256xbf16>
    %1 = vector.shape_cast %0 : vector<1x4x256xbf16> to vector<4x256xbf16>
    %c0_2 = arith.constant 0 : index
    %c0_3 = arith.constant 0 : index
    %c0_4 = arith.constant 0 : index
    %2 = vector.load %arg3[%c0_2, %c0_3, %c0_4] : memref<1x4x256xbf16, #tpu.memory_space<vmem>>, vector<1x4x256xbf16>
    %3 = vector.shape_cast %2 : vector<1x4x256xbf16> to vector<4x256xbf16>
    %4 = tpu.concatenate %1, %3 in 1 : vector<4x256xbf16>, vector<4x256xbf16> -> vector<4x512xbf16>
    %5 = tpu.iota {dimensions = array<i32: 1>} : vector<1x256xi32>
    %c256_i32 = arith.constant 256 : i32
    %6 = arith.muli %arg1, %c256_i32 : i32
    %7 = vector.broadcast %6 : i32 to vector<1x256xi32>
    %8 = arith.addi %5, %7 : vector<1x256xi32>
    %c15_i32 = arith.constant 15 : i32
    %9 = vector.broadcast %c15_i32 : i32 to vector<1x256xi32>
    %10 = arith.andi %8, %9 : vector<1x256xi32>
    %c15_i32_5 = arith.constant 15 : i32
    %11 = vector.broadcast %c15_i32_5 : i32 to vector<1x256xi32>
    %12 = arith.cmpi ne, %10, %11 : vector<1x256xi32>
    %13 = vector.extract_strided_slice %4 {offsets = [0, 1], sizes = [4, 256], strides = [1, 1]} : vector<4x512xbf16> to vector<4x256xbf16>
    %cst = arith.constant 0.000000e+00 : bf16
    %14 = vector.broadcast %cst : bf16 to vector<4x256xbf16>
    %15 = vector.shape_cast %12 : vector<1x256xi1> to vector<1x256xi1>
    %16 = vector.broadcast %15 : vector<1x256xi1> to vector<4x256xi1>
    %17 = arith.select %16, %13, %14 : vector<4x256xi1>, vector<4x256xbf16>
    %18 = vector.extract_strided_slice %4 {offsets = [0, 16], sizes = [4, 256], strides = [1, 1]} : vector<4x512xbf16> to vector<4x256xbf16>
    %19 = vector.extract_strided_slice %4 {offsets = [0, 17], sizes = [4, 256], strides = [1, 1]} : vector<4x512xbf16> to vector<4x256xbf16>
    %cst_6 = arith.constant 0.000000e+00 : bf16
    %20 = vector.broadcast %cst_6 : bf16 to vector<4x256xbf16>
    %21 = vector.shape_cast %12 : vector<1x256xi1> to vector<1x256xi1>
    %22 = vector.broadcast %21 : vector<1x256xi1> to vector<4x256xi1>
    %23 = arith.select %22, %19, %20 : vector<4x256xi1>, vector<4x256xbf16>
    %c0_7 = arith.constant 0 : index
    %c0_8 = arith.constant 0 : index
    %c0_9 = arith.constant 0 : index
    %24 = vector.load %arg4[%c0_7, %c0_8, %c0_9] : memref<4x32x4xbf16, #tpu.memory_space<vmem>>, vector<1x32x4xbf16>
    %25 = vector.shape_cast %24 : vector<1x32x4xbf16> to vector<32x4xbf16>
    %cst_10 = arith.constant dense<0.000000e+00> : vector<32x256xf32>
    %26 = tpu.matmul %25, %1, %cst_10 {dimension_numbers = #tpu.dot_dimension_numbers<[1], [0], [0], [1], [0, 0, 1, 1], [], []>} : vector<32x4xbf16>, vector<4x256xbf16>, vector<32x256xf32> -> vector<32x256xf32>
    %c1 = arith.constant 1 : index
    %c0_11 = arith.constant 0 : index
    %c0_12 = arith.constant 0 : index
    %27 = vector.load %arg4[%c1, %c0_11, %c0_12] : memref<4x32x4xbf16, #tpu.memory_space<vmem>>, vector<1x32x4xbf16>
    %28 = vector.shape_cast %27 : vector<1x32x4xbf16> to vector<32x4xbf16>
    %cst_13 = arith.constant dense<0.000000e+00> : vector<32x256xf32>
    %29 = tpu.matmul %28, %17, %cst_13 {dimension_numbers = #tpu.dot_dimension_numbers<[1], [0], [0], [1], [0, 0, 1, 1], [], []>} : vector<32x4xbf16>, vector<4x256xbf16>, vector<32x256xf32> -> vector<32x256xf32>
    %30 = arith.addf %26, %29 : vector<32x256xf32>
    %c2 = arith.constant 2 : index
    %c0_14 = arith.constant 0 : index
    %c0_15 = arith.constant 0 : index
    %31 = vector.load %arg4[%c2, %c0_14, %c0_15] : memref<4x32x4xbf16, #tpu.memory_space<vmem>>, vector<1x32x4xbf16>
    %32 = vector.shape_cast %31 : vector<1x32x4xbf16> to vector<32x4xbf16>
    %cst_16 = arith.constant dense<0.000000e+00> : vector<32x256xf32>
    %33 = tpu.matmul %32, %18, %cst_16 {dimension_numbers = #tpu.dot_dimension_numbers<[1], [0], [0], [1], [0, 0, 1, 1], [], []>} : vector<32x4xbf16>, vector<4x256xbf16>, vector<32x256xf32> -> vector<32x256xf32>
    %34 = arith.addf %30, %33 : vector<32x256xf32>
    %c3 = arith.constant 3 : index
    %c0_17 = arith.constant 0 : index
    %c0_18 = arith.constant 0 : index
    %35 = vector.load %arg4[%c3, %c0_17, %c0_18] : memref<4x32x4xbf16, #tpu.memory_space<vmem>>, vector<1x32x4xbf16>
    %36 = vector.shape_cast %35 : vector<1x32x4xbf16> to vector<32x4xbf16>
    %cst_19 = arith.constant dense<0.000000e+00> : vector<32x256xf32>
    %37 = tpu.matmul %36, %23, %cst_19 {dimension_numbers = #tpu.dot_dimension_numbers<[1], [0], [0], [1], [0, 0, 1, 1], [], []>} : vector<32x4xbf16>, vector<4x256xbf16>, vector<32x256xf32> -> vector<32x256xf32>
    %38 = arith.addf %34, %37 : vector<32x256xf32>
    %c0_20 = arith.constant 0 : index
    %c0_21 = arith.constant 0 : index
    %c0_22 = arith.constant 0 : index
    %39 = vector.load %arg5[%c0_20, %c0_21, %c0_22] : memref<2x32x1xf32, #tpu.memory_space<vmem>>, vector<1x32x1xf32>
    %40 = vector.shape_cast %39 : vector<1x32x1xf32> to vector<32x1xf32>
    %41 = vector.broadcast %40 : vector<32x1xf32> to vector<32x256xf32>
    %42 = arith.mulf %38, %41 : vector<32x256xf32>
    %c1_23 = arith.constant 1 : index
    %c0_24 = arith.constant 0 : index
    %c0_25 = arith.constant 0 : index
    %43 = vector.load %arg5[%c1_23, %c0_24, %c0_25] : memref<2x32x1xf32, #tpu.memory_space<vmem>>, vector<1x32x1xf32>
    %44 = vector.shape_cast %43 : vector<1x32x1xf32> to vector<32x1xf32>
    %45 = vector.broadcast %44 : vector<32x1xf32> to vector<32x256xf32>
    %46 = arith.addf %42, %45 : vector<32x256xf32>
    %cst_26 = arith.constant 0.000000e+00 : f32
    %47 = vector.broadcast %cst_26 : f32 to vector<32x256xf32>
    %48 = arith.maximumf %46, %47 : vector<32x256xf32>
    %49 = arith.truncf %48 : vector<32x256xf32> to vector<32x256xbf16>
    %c0_27 = arith.constant 0 : index
    %c0_28 = arith.constant 0 : index
    %c0_29 = arith.constant 0 : index
    %50 = vector.load %arg6[%c0_27, %c0_28, %c0_29] : memref<1x32x256xbf16, #tpu.memory_space<vmem>>, vector<1x32x256xbf16>
    %51 = vector.shape_cast %50 : vector<1x32x256xbf16> to vector<32x256xbf16>
    %52 = vector.shape_cast %49 : vector<32x256xbf16> to vector<1x32x256xbf16>
    tpu.vector_store %arg6[%c0_27, %c0_28, %c0_29], %52 {strides = array<i32>} : memref<1x32x256xbf16, #tpu.memory_space<vmem>>, vector<1x32x256xbf16>,
    return
  }
  func.func @transform_0(%arg0: i32, %arg1: i32) -> (i32, i32, i32) {
    %c0_i32 = arith.constant 0 : i32
    %c0_i32_0 = arith.constant 0 : i32
    return %arg0, %c0_i32, %arg1 : i32, i32, i32
  }
  func.func @transform_1(%arg0: i32, %arg1: i32) -> (i32, i32, i32) {
    %c1_i32 = arith.constant 1 : i32
    %0 = arith.addi %arg1, %c1_i32 : i32
    %c0_i32 = arith.constant 0 : i32
    %c0_i32_0 = arith.constant 0 : i32
    return %arg0, %c0_i32, %0 : i32, i32, i32
  }
  func.func @transform_2(%arg0: i32, %arg1: i32) -> (i32, i32, i32) {
    %c0_i32 = arith.constant 0 : i32
    %c0_i32_0 = arith.constant 0 : i32
    %c0_i32_1 = arith.constant 0 : i32
    %c0_i32_2 = arith.constant 0 : i32
    return %c0_i32, %c0_i32_0, %c0_i32_1 : i32, i32, i32
  }
  func.func @transform_3(%arg0: i32, %arg1: i32) -> (i32, i32, i32) {
    %c0_i32 = arith.constant 0 : i32
    %c0_i32_0 = arith.constant 0 : i32
    %c0_i32_1 = arith.constant 0 : i32
    %c0_i32_2 = arith.constant 0 : i32
    return %c0_i32, %c0_i32_0, %c0_i32_1 : i32, i32, i32
  }
  func.func @transform_4(%arg0: i32, %arg1: i32) -> (i32, i32, i32) {
    %c0_i32 = arith.constant 0 : i32
    %c0_i32_0 = arith.constant 0 : i32
    return %arg0, %c0_i32, %arg1 : i32, i32, i32
  }
}

</mosaic_0001>

<llo_original>
// kernel: tile.17
$region0: #{tile.17}
  #allocation0 [shape = 's32[1]{0}', space=sflag, size = 0x4, scoped, tag = 'scoped memory for tile.17']
  %s0 = inlined_call_operand.vmem [shape: f32[8], index: 0, kind: input, shape index: {}]
  %s1 = inlined_call_operand.vmem [shape: f32[4,8], index: 1, kind: output, shape index: {}]
  // Predicated region
  $region2: #{tile.17} parent=0 // pred_check
    _
  $region3: #{tile.17} parent=0 // pred_check_branch
    %3 = sbr.rel (0) target = $region5
  $region4: #{tile.17} parent=0 // pred_region
    _
  $region5: #{tile.17} parent=0 // pred_fallthru
    _
  %v4 = vld [vmem:[%s0] ss:$0 sm:$0xff]
  %5 = vst [vmem:[%s1] sm:$0xf] %v4

// kernel: tile.19
$region0: #{tile.19}
  %s0 = inlined_call_operand.vmem [shape: f32[4,8], index: 0, kind: input, shape index: {}]
  %s1 = inlined_call_operand.vmem [shape: f32[1,32], index: 1, kind: output, shape index: {}]
  $region1: #{tile.19} parent=0
    #allocation0 [shape = 'u8[4096]{0}', space=vmem, size = 0x1000, scoped, tag = 'scoped mem for output reshape']
    #allocation1 [shape = 'u8[4096]{0}', space=vmem, size = 0x1000, scoped, tag = 'scoped mem for input reshape']
    %s3 = ssub.s32 16, 1
    %v4 = vld [vmem:[%s0] sm:%s3]
    %5 = vst [vmem:[#allocation1] sm:%s3] %v4
    %v6 = vld [vmem:[#allocation1] sm:$0x1]
    %vm7 = vcmask 64512
    %8 = vst.msk [vmem:[#allocation0] sm:$0x1] %vm7, %v6
    %s9 = scalar_lea.vmem [#allocation1], 3
    %v10 = vld [vmem:[%s9] sm:$0x1]
    %11 = vrot.lane.b32.xlu0 %v10, 24
    %v12 = vpop.permute.xlu0 %11
    %vm13 = vcmask 261312
    %14 = vst.msk [vmem:[#allocation0] sm:$0x1] %vm13, %v12
    %s15 = scalar_lea.vmem [#allocation1], 2
    %v16 = vld [vmem:[%s15] sm:$0x1]
    %17 = vrot.lane.b32.xlu0 %v16, 16
    %v18 = vpop.permute.xlu0 %17
    %vm19 = vcmask 195712
    %20 = vst.msk [vmem:[#allocation0] sm:$0x1] %vm19, %v18
    %s21 = scalar_lea.vmem [#allocation1], 1
    %v22 = vld [vmem:[%s21] sm:$0x1]
    %23 = vrot.lane.b32.xlu0 %v22, 8
    %v24 = vpop.permute.xlu0 %23
    %vm25 = vcmask 130112
    %26 = vst.msk [vmem:[#allocation0] sm:$0x1] %vm25, %v24
    %s28 = ssub.s32 2, 1
    %v29 = vld [vmem:[#allocation0] sm:%s28]
    %s31 = ssub.s32 2, 1
    %32 = vst [vmem:[%s1] sm:%s31] %v29

// kernel: decbr2d_forward.2
$region0: #{decbr2d_forward.2}
  #allocation0 [shape = 'u32[]', space=smem, size = 0x4, offset = 0x4, fixed_abs, tag = 'smem constant byte address 0x4 - core index']
  #allocation1 [shape = 'u32[72,128]{1,0:T(1,128)}', space=vmem, size = 0x9000, scoped, tag = 'internal scratch']
  %s0 = inlined_call_operand.vmem [shape: bf16[2,4,512], index: 0, kind: input, shape index: {}, may-alias: {0,1}]
  %s1 = inlined_call_operand.vmem [shape: bf16[2,4,512], index: 1, kind: input, shape index: {}, may-alias: {0,1}]
  %s2 = inlined_call_operand.vmem [shape: bf16[4,32,4], index: 2, kind: input, shape index: {}]
  %s3 = inlined_call_operand.vmem [shape: f32[2,1,32,1], index: 3, kind: output, shape index: {0}]
  %s4 = inlined_call_operand.vmem [shape: f32[2,1,32,1], index: 4, kind: output, shape index: {1}]
  %5 = xla_tuple %s3, %s4
  %s6 = sld [smem:[#allocation0]]
  $region53: #{decbr2d_forward.2} parent=0
    _
  %s8 = ssub.s32 1, %s6
  %s9 = scalar_select 0, %s8, %s6
  loop: start=0, step=1, limit=4
  $region2: #{decbr2d_forward.2} parent=0 // loop_pre_header
    _
  $region3: #{decbr2d_forward.2} parent=0 // loop_header
    %s11 = sphi 0, %s15
    %p12 = scmp.ge.s32.totalorder %s11, 4
    %s18 = sphi 0, %s30
    %s19 = sphi 0, %s26
    %s20 = sphi 0, %s18
    %s21 = sphi 0, %s19
    %s22 = sphi 0, %s20
    %s23 = sphi 0, %s21
    %s35 = sphi 0, %s37
    %s38 = sphi 0, %s35
    %s39 = sphi 0, %s38
    %s55 = sphi 0, %s39
    %s65 = sphi 0, %s67
    %s68 = sphi 0, %s65
    %s69 = sphi 0, %s68
    %s85 = sphi 0, %s69
    %s89 = sphi 0, %s89
    %s91 = sphi 0, %s89
    %s92 = sphi 0, %s91
    %s106 = sphi 0, %s92
    %s114 = sphi 0, %s116
    %s117 = sphi 0, %s114
    %s118 = sphi 0, %s117
    %s134 = sphi 0, %s118
    %s142 = sphi 0, %s144
    %s145 = sphi 0, %s142
    %s146 = sphi 0, %s145
    %s162 = sphi 0, %s146
  $region4: #{decbr2d_forward.2} parent=0 // loop_header_branch
    %14 = sbr.rel (%p12) target = $region8
  $region5: #{decbr2d_forward.2} parent=0 // loop_body
    %s16 = ssub.s32 %s11, 1
    %s17 = ssub.s32 %s11, 2
    %s24 = sadd.s32 1, %s19
    %p25 = scmp.ge.s32.totalorder %s24, 1
    %s26 = scalar_select %p25, 0, %s24
    %s27 = sadd.s32 1, %s18
    %s28 = scalar_select %p25, %s27, %s18
    %p29 = scmp.ge.s32.totalorder %s28, 2
    %s30 = scalar_select %p29, 0, %s28
    %s31 = ssub.s32 %s18, %s30
    %s32 = ssub.s32 %s19, %s26
    %s33 = sor.u32 %s31, %s32
    %p34 = scmp.eq.s32.totalorder %s33, 0
    %s36 = sadd.s32 %s35, 1
    %s37 = scalar_select %p34, %s35, %s36
    %p40 = pneg %p34
    %p41 = scmp.eq.s32.totalorder %s11, 1
    %p42 = por %p40, %p41
    %p43 = scmp.ne.s32.totalorder %s35, %s38
    %p44 = scmp.eq.s32.totalorder %s11, 0
    %p45 = por %p43, %p44
    %p46 = scmp.ne.s32.totalorder %s35, %s38
    %p47 = scmp.eq.s32.totalorder %s16, 1
    %p48 = por %p46, %p47
    %p49 = scmp.ne.s32.totalorder %s38, %s39
    %p50 = scmp.eq.s32.totalorder %s16, 0
    %p51 = por %p49, %p50
    %p52 = scmp.ne.s32.totalorder %s38, %s39
    %p53 = scmp.eq.s32.totalorder %s17, 1
    %p54 = por %p52, %p53
    %p56 = scmp.ne.s32.totalorder %s39, %s55
    %p57 = scmp.eq.s32.totalorder %s17, 0
    %p58 = por %p56, %p57
    %s59 = sadd.s32 %s19, 1
    %s60 = sadd.s32 %s26, 1
    %s61 = ssub.s32 %s18, %s30
    %s62 = ssub.s32 %s59, %s60
    %s63 = sor.u32 %s61, %s62
    %p64 = scmp.eq.s32.totalorder %s63, 0
    %s66 = sadd.s32 %s65, 1
    %s67 = scalar_select %p64, %s65, %s66
    %p70 = pneg %p64
    %p71 = scmp.eq.s32.totalorder %s11, 1
    %p72 = por %p70, %p71
    %p73 = scmp.ne.s32.totalorder %s65, %s68
    %p74 = scmp.eq.s32.totalorder %s11, 0
    %p75 = por %p73, %p74
    %p76 = scmp.ne.s32.totalorder %s65, %s68
    %p77 = scmp.eq.s32.totalorder %s16, 1
    %p78 = por %p76, %p77
    %p79 = scmp.ne.s32.totalorder %s68, %s69
    %p80 = scmp.eq.s32.totalorder %s16, 0
    %p81 = por %p79, %p80
    %p82 = scmp.ne.s32.totalorder %s68, %s69
    %p83 = scmp.eq.s32.totalorder %s17, 1
    %p84 = por %p82, %p83
    %p86 = scmp.ne.s32.totalorder %s69, %s85
    %p87 = scmp.eq.s32.totalorder %s17, 0
    %p88 = por %p86, %p87
    %s90 = sadd.s32 %s89, 1
    %p93 = scmp.eq.s32.totalorder %s11, 1
    %p94 = scmp.ne.s32.totalorder %s89, %s91
    %p95 = scmp.eq.s32.totalorder %s11, 0
    %p96 = por %p94, %p95
    %p97 = scmp.ne.s32.totalorder %s89, %s91
    %p98 = scmp.eq.s32.totalorder %s16, 1
    %p99 = por %p97, %p98
    %p100 = scmp.ne.s32.totalorder %s91, %s92
    %p101 = scmp.eq.s32.totalorder %s16, 0
    %p102 = por %p100, %p101
    %p103 = scmp.ne.s32.totalorder %s91, %s92
    %p104 = scmp.eq.s32.totalorder %s17, 1
    %p105 = por %p103, %p104
    %p107 = scmp.ne.s32.totalorder %s92, %s106
    %p108 = scmp.eq.s32.totalorder %s17, 0
    %p109 = por %p107, %p108
    %s110 = ssub.s32 %s18, %s30
    %s111 = ssub.s32 %s19, %s26
    %s112 = sor.u32 %s110, %s111
    %p113 = scmp.eq.s32.totalorder %s112, 0
    %s115 = sadd.s32 %s114, 1
    %s116 = scalar_select %p113, %s114, %s115
    %p119 = pneg %p113
    %p120 = scmp.eq.s32.totalorder %s11, 1
    %p121 = por %p119, %p120
    %p122 = scmp.ne.s32.totalorder %s114, %s117
    %p123 = scmp.eq.s32.totalorder %s11, 0
    %p124 = por %p122, %p123
    %p125 = scmp.ne.s32.totalorder %s114, %s117
    %p126 = scmp.eq.s32.totalorder %s16, 1
    %p127 = por %p125, %p126
    %p128 = scmp.ne.s32.totalorder %s117, %s118
    %p129 = scmp.eq.s32.totalorder %s16, 0
    %p130 = por %p128, %p129
    %p131 = scmp.ne.s32.totalorder %s117, %s118
    %p132 = scmp.eq.s32.totalorder %s17, 1
    %p133 = por %p131, %p132
    %p135 = scmp.ne.s32.totalorder %s118, %s134
    %p136 = scmp.eq.s32.totalorder %s17, 0
    %p137 = por %p135, %p136
    %s138 = ssub.s32 %s18, %s30
    %s139 = ssub.s32 %s19, %s26
    %s140 = sor.u32 %s138, %s139
    %p141 = scmp.eq.s32.totalorder %s140, 0
    %s143 = sadd.s32 %s142, 1
    %s144 = scalar_select %p141, %s142, %s143
    %p147 = pneg %p141
    %p148 = scmp.eq.s32.totalorder %s11, 1
    %p149 = por %p147, %p148
    %p150 = scmp.ne.s32.totalorder %s142, %s145
    %p151 = scmp.eq.s32.totalorder %s11, 0
    %p152 = por %p150, %p151
    %p153 = scmp.ne.s32.totalorder %s142, %s145
    %p154 = scmp.eq.s32.totalorder %s16, 1
    %p155 = por %p153, %p154
    %p156 = scmp.ne.s32.totalorder %s145, %s146
    %p157 = scmp.eq.s32.totalorder %s16, 0
    %p158 = por %p156, %p157
    %p159 = scmp.ne.s32.totalorder %s145, %s146
    %p160 = scmp.eq.s32.totalorder %s17, 1
    %p161 = por %p159, %p160
    %p163 = scmp.ne.s32.totalorder %s146, %s162
    %p164 = scmp.eq.s32.totalorder %s17, 0
    %p165 = por %p163, %p164
    %p166 = scmp.le.s32.totalorder 1, %s11
    %p167 = scmp.lt.s32.totalorder %s11, 3
    %p168 = pnand %p166, %p167
    %p169 = pneg %p168
    // Predicated region
    $region9: #{decbr2d_forward.2} parent=5 // pred_check
      _
    $region10: #{decbr2d_forward.2} parent=5 // pred_check_branch
      %171 = sbr.rel (%p168) target = $region12
    $region11: #{decbr2d_forward.2} parent=5 // pred_region
      %s172 = ssub.s32 %s11, 1
      // Predicated region
      $region13: #{decbr2d_forward.2} parent=11 // pred_check
        %p173 = pneg %p102
      $region14: #{decbr2d_forward.2} parent=11 // pred_check_branch
        %175 = sbr.rel (%p173) target = $region16
      $region15: #{decbr2d_forward.2} parent=11 // pred_region
        _
      $region16: #{decbr2d_forward.2} parent=11 // pred_fallthru
        _
    $region12: #{decbr2d_forward.2} parent=5 // pred_fallthru
      _
    %p176 = scmp.lt.s32.totalorder %s11, 2
    // Predicated region
    $region17: #{decbr2d_forward.2} parent=5 // pred_check
      %p177 = pneg %p176
    $region18: #{decbr2d_forward.2} parent=5 // pred_check_branch
      %179 = sbr.rel (%p177) target = $region20
    $region19: #{decbr2d_forward.2} parent=5 // pred_region
      // Predicated region
      $region21: #{decbr2d_forward.2} parent=19 // pred_check
        %p180 = pneg %p45
      $region22: #{decbr2d_forward.2} parent=19 // pred_check_branch
        %182 = sbr.rel (%p180) target = $region24
      $region23: #{decbr2d_forward.2} parent=19 // pred_region
        %s183 = smul.u32 2, %s19
        %p184 = scmp.lt.s32.totalorder %s18, 1
        %s185 = scalar_select %p184, %s18, 1
        %p186 = scmp.lt.s32.totalorder %s183, 3
        %s187 = scalar_select %p186, %s183, 3
        %s188 = smul.addr %s185, 4
        %s189 = sadd.s32 %s187, %s188
        %s190 = smul.addr %s189, 2
        %s191 = scalar_lea.vmem %s0, %s190
        %s192 = smul.u32 2, %s19
      $region24: #{decbr2d_forward.2} parent=19 // pred_fallthru
        _
      // Predicated region
      $region25: #{decbr2d_forward.2} parent=19 // pred_check
        %p193 = pneg %p75
      $region26: #{decbr2d_forward.2} parent=19 // pred_check_branch
        %195 = sbr.rel (%p193) target = $region28
      $region27: #{decbr2d_forward.2} parent=19 // pred_region
        %s196 = sadd.s32 %s19, 1
        %s197 = smul.u32 2, %s196
        %p198 = scmp.lt.s32.totalorder %s18, 1
        %s199 = scalar_select %p198, %s18, 1
        %p200 = scmp.lt.s32.totalorder %s197, 3
        %s201 = scalar_select %p200, %s197, 3
        %s202 = smul.addr %s199, 4
        %s203 = sadd.s32 %s201, %s202
        %s204 = smul.addr %s203, 2
        %s205 = scalar_lea.vmem %s1, %s204
        %s206 = sadd.s32 %s19, 1
        %s207 = smul.u32 2, %s206
      $region28: #{decbr2d_forward.2} parent=19 // pred_fallthru
        _
    $region20: #{decbr2d_forward.2} parent=5 // pred_fallthru
      _
    %p208 = scmp.le.s32.totalorder 1, %s11
    %p209 = scmp.lt.s32.totalorder %s11, 3
    %p210 = pnand %p208, %p209
    %p211 = pneg %p210
    // Predicated region
    $region29: #{decbr2d_forward.2} parent=5 // pred_check
      _
    $region30: #{decbr2d_forward.2} parent=5 // pred_check_branch
      %213 = sbr.rel (%p210) target = $region32
    $region31: #{decbr2d_forward.2} parent=5 // pred_region
      %s214 = ssub.s32 %s11, 1
      %s215 = smul.u32 2, %s21
      %p216 = scmp.lt.s32.totalorder %s20, 1
      %s217 = scalar_select %p216, %s20, 1
      %p218 = scmp.lt.s32.totalorder %s215, 3
      %s219 = scalar_select %p218, %s215, 3
      %s220 = smul.addr %s217, 4
      %s221 = sadd.s32 %s219, %s220
      %s222 = smul.addr %s221, 2
      %s223 = scalar_lea.vmem %s0, %s222
      %p224 = pneg %p51
      %p225 = pneg %p48
      %s226 = sadd.s32 %s21, 1
      %s227 = smul.u32 2, %s226
      %p228 = scmp.lt.s32.totalorder %s20, 1
      %s229 = scalar_select %p228, %s20, 1
      %p230 = scmp.lt.s32.totalorder %s227, 3
      %s231 = scalar_select %p230, %s227, 3
      %s232 = smul.addr %s229, 4
      %s233 = sadd.s32 %s231, %s232
      %s234 = smul.addr %s233, 2
      %s235 = scalar_lea.vmem %s1, %s234
      %p236 = pneg %p81
      %p237 = pneg %p78
      %p238 = pneg %p102
      %p239 = pneg %p99
      %p240 = pneg %p130
      %p241 = pneg %p127
      %p242 = scmp.lt.s32.totalorder %s20, 1
      %s243 = scalar_select %p242, %s20, 1
      %p244 = scmp.lt.s32.totalorder %s21, 0
      %s245 = scalar_select %p244, %s21, 0
      %s246 = smul.addr %s245, 4
      %s247 = smul.addr %s243, 4
      %s248 = sadd.s32 %s246, %s247
      %s249 = smul.addr %s248, 8
      %s250 = scalar_lea.vmem %s3, %s249
      %p251 = pneg %p158
      %p252 = pneg %p155
      %p253 = scmp.lt.s32.totalorder %s20, 1
      %s254 = scalar_select %p253, %s20, 1
      %p255 = scmp.lt.s32.totalorder %s21, 0
      %s256 = scalar_select %p255, %s21, 0
      %s257 = smul.addr %s256, 4
      %s258 = smul.addr %s254, 4
      %s259 = sadd.s32 %s257, %s258
      %s260 = smul.addr %s259, 8
      %s261 = scalar_lea.vmem %s4, %s260
      %s262 = smul.u32 2, %s21
      %p263 = scmp.lt.s32.totalorder %s20, 1
      %s264 = scalar_select %p263, %s20, 1
      %p265 = scmp.lt.s32.totalorder %s262, 3
      %s266 = scalar_select %p265, %s262, 3
      %s267 = smul.addr %s264, 4
      %s268 = sadd.s32 %s266, %s267
      %s269 = smul.addr %s268, 2
      %s270 = scalar_lea.vmem %s0, %s269
      %s271 = smul.u32 2, %s21
      %s272 = sadd.s32 %s21, 1
      %s273 = smul.u32 2, %s272
      %p274 = scmp.lt.s32.totalorder %s20, 1
      %s275 = scalar_select %p274, %s20, 1
      %p276 = scmp.lt.s32.totalorder %s273, 3
      %s277 = scalar_select %p276, %s273, 3
      %s278 = smul.addr %s275, 4
      %s279 = sadd.s32 %s277, %s278
      %s280 = smul.addr %s279, 2
      %s281 = scalar_lea.vmem %s1, %s280
      %s282 = sadd.s32 %s21, 1
      %s283 = smul.u32 2, %s282
      %p284 = scmp.lt.s32.totalorder %s20, 1
      %s285 = scalar_select %p284, %s20, 1
      %p286 = scmp.lt.s32.totalorder %s21, 0
      %s287 = scalar_select %p286, %s21, 0
      %s288 = smul.addr %s287, 4
      %s289 = smul.addr %s285, 4
      %s290 = sadd.s32 %s288, %s289
      %s291 = smul.addr %s290, 8
      %s292 = scalar_lea.vmem %s3, %s291
      %p293 = scmp.lt.s32.totalorder %s20, 1
      %s294 = scalar_select %p293, %s20, 1
      %p295 = scmp.lt.s32.totalorder %s21, 0
      %s296 = scalar_select %p295, %s21, 0
      %s297 = smul.addr %s296, 4
      %s298 = smul.addr %s294, 4
      %s299 = sadd.s32 %s297, %s298
      %s300 = smul.addr %s299, 8
      %s301 = scalar_lea.vmem %s4, %s300
      %v305 = vld [vmem:[%s270] sm:$0xf]
      %v306 = vld [vmem:[%s281] sm:$0xf]
      %308 = vst [vmem:[#allocation1] ss:$4 sm:$0xff] %v305
      %v309 = vld.sshfl [vmem:[#allocation1] sm:$0xff pattern:$0x73625140]
      %v311 = vld.sshfl [vmem:[#allocation1 + $0x8] sm:$0xff pattern:$0x73625140]
      %316 = vst [vmem:[#allocation1] ss:$4 sm:$0xff] %v306
      %v317 = vld.sshfl [vmem:[#allocation1] sm:$0xff pattern:$0x73625140]
      %v320 = vlaneseq
      %v321 = vand.u32 %v320, 127
      %v322 = vadd.s32 %v321, 128
      %s323 = smul.u32 %s21, 256
      %v324 = vstv %s323
      %v325 = vadd.s32 %v321, %v324
      %v326 = vadd.s32 %v322, %v324
      %v327 = vand.u32 %v325, 15
      %v328 = vand.u32 %v326, 15
      %vm329 = vcmp.ne.s32.totalorder %v327, 15
      %vm330 = vcmp.ne.s32.totalorder %v328, 15
      %v331 = vsel %vm329, 1, 0
      %v332 = vsel %vm330, 1, 0
      %vm333 = vcmp.eq.s32.totalorder %v331, 1
      %vm334 = vcmp.eq.s32.totalorder %v332, 1
      %vm335 = vmpackc.low %vm334, %vm333
      %v336 = vsel %vm335, 65537, 0
      %v337 = vperm.slane %v336, 0
      %v338 = vperm.slane %v336, 4
      %339 = vrot.lane.b32.xlu0 %v337, 1
      %v340 = vpop.permute.xlu0 %339
      %341 = vrot.lane.b32.xlu0 %v338, 1
      %v342 = vpop.permute.xlu0 %341
      %vm343 = vcmask 7168
      %v344 = vsel %vm343, %v340, %v342
      %v345 = vunpack.c.l.b16 %v340
      %v346 = vunpack.c.h.b16 %v340
      %v347 = vunpack.c.l.b16 0
      %v348 = vunpack.c.h.b16 0
      %vm349 = vcmp.ne.s32.totalorder %v345, %v347
      %vm350 = vcmp.ne.s32.totalorder %v346, %v348
      %vm351 = vmpackc.low %vm350, %vm349
      %v352 = vunpack.c.l.b16 %v344
      %v353 = vunpack.c.h.b16 %v344
      %v354 = vunpack.c.l.b16 0
      %v355 = vunpack.c.h.b16 0
      %vm356 = vcmp.ne.s32.totalorder %v352, %v354
      %vm357 = vcmp.ne.s32.totalorder %v353, %v355
      %vm358 = vmpackc.low %vm357, %vm356
      %v359 = vunpack.c.l.b16 %v342
      %v360 = vunpack.c.h.b16 %v342
      %v361 = vunpack.c.l.b16 0
      %v362 = vunpack.c.h.b16 0
      %vm363 = vcmp.ne.s32.totalorder %v359, %v361
      %vm364 = vcmp.ne.s32.totalorder %v360, %v362
      %vm365 = vmpackc.low %vm364, %vm363
      %v366 = vsel %vm351, %v309, 0
      %v367 = vsel %vm358, %v311, 0
      %v368 = vsel %vm365, %v317, 0
      %369 = vrot.lane.b32.xlu0 %v337, 17
      %v370 = vpop.permute.xlu0 %369
      %371 = vrot.lane.b32.xlu0 %v338, 17
      %v372 = vpop.permute.xlu0 %371
      %vm373 = vcmask 138240
      %v374 = vsel %vm373, %v370, %v372
      %v375 = vunpack.c.l.b16 %v370
      %v376 = vunpack.c.h.b16 %v370
      %v377 = vunpack.c.l.b16 0
      %v378 = vunpack.c.h.b16 0
      %vm379 = vcmp.ne.s32.totalorder %v375, %v377
      %vm380 = vcmp.ne.s32.totalorder %v376, %v378
      %vm381 = vmpackc.low %vm380, %vm379
      %v382 = vunpack.c.l.b16 %v374
      %v383 = vunpack.c.h.b16 %v374
      %v384 = vunpack.c.l.b16 0
      %v385 = vunpack.c.h.b16 0
      %vm386 = vcmp.ne.s32.totalorder %v382, %v384
      %vm387 = vcmp.ne.s32.totalorder %v383, %v385
      %vm388 = vmpackc.low %vm387, %vm386
      %v389 = vunpack.c.l.b16 %v372
      %v390 = vunpack.c.h.b16 %v372
      %v391 = vunpack.c.l.b16 0
      %v392 = vunpack.c.h.b16 0
      %vm393 = vcmp.ne.s32.totalorder %v389, %v391
      %vm394 = vcmp.ne.s32.totalorder %v390, %v392
      %vm395 = vmpackc.low %vm394, %vm393
      %v396 = vsel %vm381, %v309, 0
      %v397 = vsel %vm388, %v311, 0
      %v398 = vsel %vm395, %v317, 0
      %v399 = vld [vmem:[%s2] sm:$0xf]
      %v400 = vld [vmem:[%s2 + $0x4] sm:$0xf]
      %v401 = vld [vmem:[%s2 + $0x8] sm:$0xf]
      %v402 = vld [vmem:[%s2 + $0xc] sm:$0xf]
      %s403 = scalar_lea.vmem %s2, 16
      %v404 = vld [vmem:[%s403] sm:$0xf]
      %v405 = vld [vmem:[%s403 + $0x4] sm:$0xf]
      %v406 = vld [vmem:[%s403 + $0x8] sm:$0xf]
      %v407 = vld [vmem:[%s403 + $0xc] sm:$0xf]
      %v412 = vunpack.c.l.b16 %v404
      %v413 = vunpack.c.l.b16 %v405
      %v414 = vunpack.c.l.b16 %v406
      %v415 = vunpack.c.l.b16 %v407
      %v416 = vpack.c.b16 %v413, %v412
      %v417 = vpack.c.b16 %v415, %v414
      %421 = vrot.lane.b32.xlu0 %v366, 127
      %v422 = vpop.permute.xlu0 %421
      %423 = vrot.lane.b32.xlu0 %v367, 127
      %v424 = vpop.permute.xlu0 %423
      %425 = vrot.lane.b32.xlu0 %v368, 127
      %v426 = vpop.permute.xlu0 %425
      %vm427 = vcmask 1039360
      %v428 = vsel %vm427, %v422, %v424
      %v429 = vsel %vm427, %v424, %v426
      %vm430 = vcmask 31744
      %v432 = vsel %vm430, %v416, 0
      %v435 = vsel %vm430, %v417, 0
      %vm437 = vcmask 1041408
      %v439 = vsel %vm437, %v428, 0
      %v442 = vsel %vm437, %v429, 0
      %444 = vmatpush.bf16.msra.mxu0 0
      %445 = vmatpush.bf16.msra.mxu0 0
      %446 = vmatpush.bf16.msra.mxu0 0
      %447 = vmatpush.bf16.msra.mxu0 0
      %448 = vmatpush.bf16.msra.mxu0 0
      %449 = vmatpush.bf16.msra.mxu0 0
      %450 = vmatpush.bf16.msra.mxu0 0
      %451 = vmatpush.bf16.msra.mxu0 %v439
      %452 = vmatmul.bf16.gmra.mxu0 %v432
      %v453 = vpop.f32.mrf.mxu0
      %v454 = vadd.f32 0.0, %v453
      %v455 = vpop.f32.mrf.mxu0
      %v456 = vadd.f32 0.0, %v455
      %457 = vmatmul.bf16.gmra.mxu0 %v435
      %v458 = vpop.f32.mrf.mxu0
      %v459 = vadd.f32 0.0, %v458
      %v460 = vpop.f32.mrf.mxu0
      %v461 = vadd.f32 0.0, %v460
      %462 = vdwg.mxu0
      %463 = vmatpush.bf16.msra.mxu0 0
      %464 = vmatpush.bf16.msra.mxu0 0
      %465 = vmatpush.bf16.msra.mxu0 0
      %466 = vmatpush.bf16.msra.mxu0 0
      %467 = vmatpush.bf16.msra.mxu0 0
      %468 = vmatpush.bf16.msra.mxu0 0
      %469 = vmatpush.bf16.msra.mxu0 0
      %470 = vmatpush.bf16.msra.mxu0 %v442
      %471 = vmatmul.bf16.gmra.mxu0 %v432
      %v472 = vpop.f32.mrf.mxu0
      %v473 = vadd.f32 0.0, %v472
      %v474 = vpop.f32.mrf.mxu0
      %v475 = vadd.f32 0.0, %v474
      %476 = vmatmul.bf16.gmra.mxu0 %v435
      %v477 = vpop.f32.mrf.mxu0
      %v478 = vadd.f32 0.0, %v477
      %v479 = vpop.f32.mrf.mxu0
      %v480 = vadd.f32 0.0, %v479
      %481 = vdwg.mxu0
      %v486 = vunpack.c.l.b16 %v399
      %v487 = vunpack.c.l.b16 %v400
      %v488 = vunpack.c.l.b16 %v401
      %v489 = vunpack.c.l.b16 %v402
      %v490 = vpack.c.b16 %v487, %v486
      %v491 = vpack.c.b16 %v489, %v488
      %492 = vst [vmem:[#allocation1] ss:$4 sm:$0xff] %v305
      %v493 = vld.sshfl [vmem:[#allocation1] sm:$0xff pattern:$0x73625140]
      %v494 = vld.sshfl [vmem:[#allocation1 + $0x8] sm:$0xff pattern:$0x73625140]
      %v496 = vsel %vm430, %v490, 0
      %v499 = vsel %vm430, %v491, 0
      %v501 = vsel %vm437, %v493, 0
      %v503 = vsel %vm437, %v494, 0
      %505 = vmatpush.bf16.msra.mxu0 0
      %506 = vmatpush.bf16.msra.mxu0 0
      %507 = vmatpush.bf16.msra.mxu0 0
      %508 = vmatpush.bf16.msra.mxu0 0
      %509 = vmatpush.bf16.msra.mxu0 0
      %510 = vmatpush.bf16.msra.mxu0 0
      %511 = vmatpush.bf16.msra.mxu0 0
      %512 = vmatpush.bf16.msra.mxu0 %v501
      %513 = vmatmul.bf16.gmra.mxu0 %v496
      %v514 = vpop.f32.mrf.mxu0
      %v515 = vadd.f32 %v454, %v514
      %v516 = vpop.f32.mrf.mxu0
      %v517 = vadd.f32 %v456, %v516
      %518 = vmatmul.bf16.gmra.mxu0 %v499
      %v519 = vpop.f32.mrf.mxu0
      %v520 = vadd.f32 %v459, %v519
      %v521 = vpop.f32.mrf.mxu0
      %v522 = vadd.f32 %v461, %v521
      %523 = vdwg.mxu0
      %524 = vmatpush.bf16.msra.mxu0 0
      %525 = vmatpush.bf16.msra.mxu0 0
      %526 = vmatpush.bf16.msra.mxu0 0
      %527 = vmatpush.bf16.msra.mxu0 0
      %528 = vmatpush.bf16.msra.mxu0 0
      %529 = vmatpush.bf16.msra.mxu0 0
      %530 = vmatpush.bf16.msra.mxu0 0
      %531 = vmatpush.bf16.msra.mxu0 %v503
      %532 = vmatmul.bf16.gmra.mxu0 %v496
      %v533 = vpop.f32.mrf.mxu0
      %v534 = vadd.f32 %v473, %v533
      %v535 = vpop.f32.mrf.mxu0
      %v536 = vadd.f32 %v475, %v535
      %537 = vmatmul.bf16.gmra.mxu0 %v499
      %v538 = vpop.f32.mrf.mxu0
      %v539 = vadd.f32 %v478, %v538
      %v540 = vpop.f32.mrf.mxu0
      %v541 = vadd.f32 %v480, %v540
      %542 = vdwg.mxu0
      %s543 = scalar_lea.vmem %s2, 32
      %v544 = vld [vmem:[%s543] sm:$0xf]
      %v545 = vld [vmem:[%s543 + $0x4] sm:$0xf]
      %v546 = vld [vmem:[%s543 + $0x8] sm:$0xf]
      %v547 = vld [vmem:[%s543 + $0xc] sm:$0xf]
      %v552 = vunpack.c.l.b16 %v544
      %v553 = vunpack.c.l.b16 %v545
      %v554 = vunpack.c.l.b16 %v546
      %v555 = vunpack.c.l.b16 %v547
      %v556 = vpack.c.b16 %v553, %v552
      %v557 = vpack.c.b16 %v555, %v554
      %558 = vrot.lane.b32.xlu0 %v309, 112
      %v559 = vpop.permute.xlu0 %558
      %560 = vrot.lane.b32.xlu0 %v311, 112
      %v561 = vpop.permute.xlu0 %560
      %562 = vrot.lane.b32.xlu0 %v317, 112
      %v563 = vpop.permute.xlu0 %562
      %vm564 = vcmask 916480
      %v565 = vsel %vm564, %v559, %v561
      %v566 = vsel %vm564, %v561, %v563
      %v568 = vsel %vm430, %v556, 0
      %v571 = vsel %vm430, %v557, 0
      %v574 = vsel %vm437, %v565, 0
      %v577 = vsel %vm437, %v566, 0
      %579 = vmatpush.bf16.msra.mxu0 0
      %580 = vmatpush.bf16.msra.mxu0 0
      %581 = vmatpush.bf16.msra.mxu0 0
      %582 = vmatpush.bf16.msra.mxu0 0
      %583 = vmatpush.bf16.msra.mxu0 0
      %584 = vmatpush.bf16.msra.mxu0 0
      %585 = vmatpush.bf16.msra.mxu0 0
      %586 = vmatpush.bf16.msra.mxu0 %v574
      %587 = vmatmul.bf16.gmra.mxu0 %v568
      %v588 = vpop.f32.mrf.mxu0
      %v589 = vadd.f32 0.0, %v588
      %v590 = vpop.f32.mrf.mxu0
      %v591 = vadd.f32 0.0, %v590
      %592 = vmatmul.bf16.gmra.mxu0 %v571
      %v593 = vpop.f32.mrf.mxu0
      %v594 = vadd.f32 0.0, %v593
      %v595 = vpop.f32.mrf.mxu0
      %v596 = vadd.f32 0.0, %v595
      %597 = vdwg.mxu0
      %598 = vmatpush.bf16.msra.mxu0 0
      %599 = vmatpush.bf16.msra.mxu0 0
      %600 = vmatpush.bf16.msra.mxu0 0
      %601 = vmatpush.bf16.msra.mxu0 0
      %602 = vmatpush.bf16.msra.mxu0 0
      %603 = vmatpush.bf16.msra.mxu0 0
      %604 = vmatpush.bf16.msra.mxu0 0
      %605 = vmatpush.bf16.msra.mxu0 %v577
      %606 = vmatmul.bf16.gmra.mxu0 %v568
      %v607 = vpop.f32.mrf.mxu0
      %v608 = vadd.f32 0.0, %v607
      %v609 = vpop.f32.mrf.mxu0
      %v610 = vadd.f32 0.0, %v609
      %611 = vmatmul.bf16.gmra.mxu0 %v571
      %v612 = vpop.f32.mrf.mxu0
      %v613 = vadd.f32 0.0, %v612
      %v614 = vpop.f32.mrf.mxu0
      %v615 = vadd.f32 0.0, %v614
      %616 = vdwg.mxu0
      %v617 = vadd.f32 %v515, %v589
      %v618 = vadd.f32 %v534, %v608
      %v619 = vadd.f32 %v517, %v591
      %v620 = vadd.f32 %v536, %v610
      %v621 = vadd.f32 %v520, %v594
      %v622 = vadd.f32 %v539, %v613
      %v623 = vadd.f32 %v522, %v596
      %v624 = vadd.f32 %v541, %v615
      %s625 = scalar_lea.vmem %s2, 48
      %v626 = vld [vmem:[%s625] sm:$0xf]
      %v627 = vld [vmem:[%s625 + $0x4] sm:$0xf]
      %v628 = vld [vmem:[%s625 + $0x8] sm:$0xf]
      %v629 = vld [vmem:[%s625 + $0xc] sm:$0xf]
      %v634 = vunpack.c.l.b16 %v626
      %v635 = vunpack.c.l.b16 %v627
      %v636 = vunpack.c.l.b16 %v628
      %v637 = vunpack.c.l.b16 %v629
      %v638 = vpack.c.b16 %v635, %v634
      %v639 = vpack.c.b16 %v637, %v636
      %643 = vrot.lane.b32.xlu0 %v396, 111
      %v644 = vpop.permute.xlu0 %643
      %645 = vrot.lane.b32.xlu0 %v397, 111
      %v646 = vpop.permute.xlu0 %645
      %647 = vrot.lane.b32.xlu0 %v398, 111
      %v648 = vpop.permute.xlu0 %647
      %vm649 = vcmask 908288
      %v650 = vsel %vm649, %v644, %v646
      %v651 = vsel %vm649, %v646, %v648
      %v653 = vsel %vm430, %v638, 0
      %v656 = vsel %vm430, %v639, 0
      %v659 = vsel %vm437, %v650, 0
      %v662 = vsel %vm437, %v651, 0
      %664 = vmatpush.bf16.msra.mxu0 0
      %665 = vmatpush.bf16.msra.mxu0 0
      %666 = vmatpush.bf16.msra.mxu0 0
      %667 = vmatpush.bf16.msra.mxu0 0
      %668 = vmatpush.bf16.msra.mxu0 0
      %669 = vmatpush.bf16.msra.mxu0 0
      %670 = vmatpush.bf16.msra.mxu0 0
      %671 = vmatpush.bf16.msra.mxu0 %v659
      %672 = vmatmul.bf16.gmra.mxu0 %v653
      %v673 = vpop.f32.mrf.mxu0
      %v674 = vadd.f32 0.0, %v673
      %v675 = vpop.f32.mrf.mxu0
      %v676 = vadd.f32 0.0, %v675
      %677 = vmatmul.bf16.gmra.mxu0 %v656
      %v678 = vpop.f32.mrf.mxu0
      %v679 = vadd.f32 0.0, %v678
      %v680 = vpop.f32.mrf.mxu0
      %v681 = vadd.f32 0.0, %v680
      %682 = vdwg.mxu0
      %683 = vmatpush.bf16.msra.mxu0 0
      %684 = vmatpush.bf16.msra.mxu0 0
      %685 = vmatpush.bf16.msra.mxu0 0
      %686 = vmatpush.bf16.msra.mxu0 0
      %687 = vmatpush.bf16.msra.mxu0 0
      %688 = vmatpush.bf16.msra.mxu0 0
      %689 = vmatpush.bf16.msra.mxu0 0
      %690 = vmatpush.bf16.msra.mxu0 %v662
      %691 = vmatmul.bf16.gmra.mxu0 %v653
      %v692 = vpop.f32.mrf.mxu0
      %v693 = vadd.f32 0.0, %v692
      %v694 = vpop.f32.mrf.mxu0
      %v695 = vadd.f32 0.0, %v694
      %696 = vmatmul.bf16.gmra.mxu0 %v656
      %v697 = vpop.f32.mrf.mxu0
      %v698 = vadd.f32 0.0, %v697
      %v699 = vpop.f32.mrf.mxu0
      %v700 = vadd.f32 0.0, %v699
      %701 = vdwg.mxu0
      %v702 = vadd.f32 %v617, %v674
      %v703 = vadd.f32 %v618, %v693
      %v704 = vadd.f32 %v619, %v676
      %v705 = vadd.f32 %v620, %v695
      %v706 = vadd.f32 %v621, %v679
      %v707 = vadd.f32 %v622, %v698
      %v708 = vadd.f32 %v623, %v681
      %v709 = vadd.f32 %v624, %v700
      %v710 = vadd.f32 %v702, %v703
      %711 = vadd.xlane.f32.xlu0 %v710
      %v712 = vpop.xlane.xlu0 %711
      %v713 = vadd.f32 %v704, %v705
      %714 = vadd.xlane.f32.xlu0 %v713
      %v715 = vpop.xlane.xlu0 %714
      %v716 = vadd.f32 %v706, %v707
      %717 = vadd.xlane.f32.xlu0 %v716
      %v718 = vpop.xlane.xlu0 %717
      %v719 = vadd.f32 %v708, %v709
      %720 = vadd.xlane.f32.xlu0 %v719
      %v721 = vpop.xlane.xlu0 %720
      %vm722 = vcmask 7168
      %723 = vst.msk [vmem:[%s292] sm:$0xff] %vm722, %v712
      %724 = vst.msk [vmem:[%s292 + $0x8] sm:$0xff] %vm722, %v715
      %725 = vst.msk [vmem:[%s292 + $0x10] sm:$0xff] %vm722, %v718
      %726 = vst.msk [vmem:[%s292 + $0x18] sm:$0xff] %vm722, %v721
      %v727 = vmul.f32 %v702, %v702
      %v728 = vmul.f32 %v703, %v703
      %v729 = vmul.f32 %v704, %v704
      %v730 = vmul.f32 %v705, %v705
      %v731 = vmul.f32 %v706, %v706
      %v732 = vmul.f32 %v707, %v707
      %v733 = vmul.f32 %v708, %v708
      %v734 = vmul.f32 %v709, %v709
      %v735 = vadd.f32 %v727, %v728
      %736 = vadd.xlane.f32.xlu0 %v735
      %v737 = vpop.xlane.xlu0 %736
      %v738 = vadd.f32 %v729, %v730
      %739 = vadd.xlane.f32.xlu0 %v738
      %v740 = vpop.xlane.xlu0 %739
      %v741 = vadd.f32 %v731, %v732
      %742 = vadd.xlane.f32.xlu0 %v741
      %v743 = vpop.xlane.xlu0 %742
      %v744 = vadd.f32 %v733, %v734
      %745 = vadd.xlane.f32.xlu0 %v744
      %v746 = vpop.xlane.xlu0 %745
      %747 = vst.msk [vmem:[%s301] sm:$0xff] %vm722, %v737
      %748 = vst.msk [vmem:[%s301 + $0x8] sm:$0xff] %vm722, %v740
      %749 = vst.msk [vmem:[%s301 + $0x10] sm:$0xff] %vm722, %v743
      %750 = vst.msk [vmem:[%s301 + $0x18] sm:$0xff] %vm722, %v746
      %p751 = scmp.lt.s32.totalorder %s20, 1
      %s752 = scalar_select %p751, %s20, 1
      %p753 = scmp.lt.s32.totalorder %s21, 0
      %s754 = scalar_select %p753, %s21, 0
      %s755 = smul.addr %s754, 4
      %s756 = smul.addr %s752, 4
      %s757 = sadd.s32 %s755, %s756
      %s758 = smul.addr %s757, 8
      %s759 = scalar_lea.vmem %s3, %s758
      %p760 = scmp.lt.s32.totalorder %s20, 1
      %s761 = scalar_select %p760, %s20, 1
      %p762 = scmp.lt.s32.totalorder %s21, 0
      %s763 = scalar_select %p762, %s21, 0
      %s764 = smul.addr %s763, 4
      %s765 = smul.addr %s761, 4
      %s766 = sadd.s32 %s764, %s765
      %s767 = smul.addr %s766, 8
      %s768 = scalar_lea.vmem %s4, %s767
      // Predicated region
      $region33: #{decbr2d_forward.2} parent=31 // pred_check
        %p769 = pneg %p127
      $region34: #{decbr2d_forward.2} parent=31 // pred_check_branch
        %771 = sbr.rel (%p769) target = $region36
      $region35: #{decbr2d_forward.2} parent=31 // pred_region
        _
      $region36: #{decbr2d_forward.2} parent=31 // pred_fallthru
        _
      // Predicated region
      $region37: #{decbr2d_forward.2} parent=31 // pred_check
        %p772 = pneg %p155
      $region38: #{decbr2d_forward.2} parent=31 // pred_check_branch
        %774 = sbr.rel (%p772) target = $region40
      $region39: #{decbr2d_forward.2} parent=31 // pred_region
        _
      $region40: #{decbr2d_forward.2} parent=31 // pred_fallthru
        _
    $region32: #{decbr2d_forward.2} parent=5 // pred_fallthru
      _
    %p775 = scmp.le.s32.totalorder 2, %s11
    // Predicated region
    $region41: #{decbr2d_forward.2} parent=5 // pred_check
      %p776 = pneg %p775
    $region42: #{decbr2d_forward.2} parent=5 // pred_check_branch
      %778 = sbr.rel (%p776) target = $region44
    $region43: #{decbr2d_forward.2} parent=5 // pred_region
      %s779 = ssub.s32 %s11, 2
      // Predicated region
      $region45: #{decbr2d_forward.2} parent=43 // pred_check
        %p780 = pneg %p133
      $region46: #{decbr2d_forward.2} parent=43 // pred_check_branch
        %782 = sbr.rel (%p780) target = $region48
      $region47: #{decbr2d_forward.2} parent=43 // pred_region
        %p783 = scmp.lt.s32.totalorder %s22, 1
        %s784 = scalar_select %p783, %s22, 1
        %p785 = scmp.lt.s32.totalorder %s23, 0
        %s786 = scalar_select %p785, %s23, 0
        %s787 = smul.addr %s786, 4
        %s788 = smul.addr %s784, 4
        %s789 = sadd.s32 %s787, %s788
        %s790 = smul.addr %s789, 8
        %s791 = scalar_lea.vmem %s3, %s790
      $region48: #{decbr2d_forward.2} parent=43 // pred_fallthru
        _
      // Predicated region
      $region49: #{decbr2d_forward.2} parent=43 // pred_check
        %p792 = pneg %p161
      $region50: #{decbr2d_forward.2} parent=43 // pred_check_branch
        %794 = sbr.rel (%p792) target = $region52
      $region51: #{decbr2d_forward.2} parent=43 // pred_region
        %p795 = scmp.lt.s32.totalorder %s22, 1
        %s796 = scalar_select %p795, %s22, 1
        %p797 = scmp.lt.s32.totalorder %s23, 0
        %s798 = scalar_select %p797, %s23, 0
        %s799 = smul.addr %s798, 4
        %s800 = smul.addr %s796, 4
        %s801 = sadd.s32 %s799, %s800
        %s802 = smul.addr %s801, 8
        %s803 = scalar_lea.vmem %s4, %s802
      $region52: #{decbr2d_forward.2} parent=43 // pred_fallthru
        _
    $region44: #{decbr2d_forward.2} parent=5 // pred_fallthru
      _
  $region6: #{decbr2d_forward.2} parent=0 // loop_footer
    %s15 = sadd.s32 1, %s11
  $region7: #{decbr2d_forward.2} parent=0 // loop_footer_branch
    %10 = sbr.rel target = $region3
  $region8: #{decbr2d_forward.2} parent=0 // loop_exit
    _

// kernel: decbr2d_forward.3
$region0: #{decbr2d_forward.3}
  #allocation0 [shape = 'u32[]', space=smem, size = 0x4, offset = 0x4, fixed_abs, tag = 'smem constant byte address 0x4 - core index']
  #allocation1 [shape = 'u32[72,128]{1,0:T(1,128)}', space=vmem, size = 0x9000, scoped, tag = 'internal scratch']
  %s0 = inlined_call_operand.vmem [shape: bf16[2,4,512], index: 0, kind: input, shape index: {}, may-alias: {0,1}]
  %s1 = inlined_call_operand.vmem [shape: bf16[2,4,512], index: 1, kind: input, shape index: {}, may-alias: {0,1}]
  %s2 = inlined_call_operand.vmem [shape: bf16[4,32,4], index: 2, kind: input, shape index: {}]
  %s3 = inlined_call_operand.vmem [shape: f32[2,32,1], index: 3, kind: input, shape index: {}]
  %s4 = inlined_call_operand.vmem [shape: bf16[2,32,256], index: 4, kind: output, shape index: {}]
  %s5 = sld [smem:[#allocation0]]
  $region49: #{decbr2d_forward.3} parent=0
    _
  %s7 = ssub.s32 1, %s5
  %s8 = scalar_select 0, %s7, %s5
  loop: start=0, step=1, limit=4
  $region2: #{decbr2d_forward.3} parent=0 // loop_pre_header
    _
  $region3: #{decbr2d_forward.3} parent=0 // loop_header
    %s10 = sphi 0, %s14
    %p11 = scmp.ge.s32.totalorder %s10, 4
    %s17 = sphi 0, %s29
    %s18 = sphi 0, %s25
    %s19 = sphi 0, %s17
    %s20 = sphi 0, %s18
    %s21 = sphi 0, %s19
    %s22 = sphi 0, %s20
    %s34 = sphi 0, %s36
    %s37 = sphi 0, %s34
    %s38 = sphi 0, %s37
    %s54 = sphi 0, %s38
    %s64 = sphi 0, %s66
    %s67 = sphi 0, %s64
    %s68 = sphi 0, %s67
    %s84 = sphi 0, %s68
    %s88 = sphi 0, %s88
    %s90 = sphi 0, %s88
    %s91 = sphi 0, %s90
    %s105 = sphi 0, %s91
    %s109 = sphi 0, %s109
    %s111 = sphi 0, %s109
    %s112 = sphi 0, %s111
    %s126 = sphi 0, %s112
    %s134 = sphi 0, %s136
    %s137 = sphi 0, %s134
    %s138 = sphi 0, %s137
    %s154 = sphi 0, %s138
  $region4: #{decbr2d_forward.3} parent=0 // loop_header_branch
    %13 = sbr.rel (%p11) target = $region8
  $region5: #{decbr2d_forward.3} parent=0 // loop_body
    %s15 = ssub.s32 %s10, 1
    %s16 = ssub.s32 %s10, 2
    %s23 = sadd.s32 1, %s18
    %p24 = scmp.ge.s32.totalorder %s23, 1
    %s25 = scalar_select %p24, 0, %s23
    %s26 = sadd.s32 1, %s17
    %s27 = scalar_select %p24, %s26, %s17
    %p28 = scmp.ge.s32.totalorder %s27, 2
    %s29 = scalar_select %p28, 0, %s27
    %s30 = ssub.s32 %s17, %s29
    %s31 = ssub.s32 %s18, %s25
    %s32 = sor.u32 %s30, %s31
    %p33 = scmp.eq.s32.totalorder %s32, 0
    %s35 = sadd.s32 %s34, 1
    %s36 = scalar_select %p33, %s34, %s35
    %p39 = pneg %p33
    %p40 = scmp.eq.s32.totalorder %s10, 1
    %p41 = por %p39, %p40
    %p42 = scmp.ne.s32.totalorder %s34, %s37
    %p43 = scmp.eq.s32.totalorder %s10, 0
    %p44 = por %p42, %p43
    %p45 = scmp.ne.s32.totalorder %s34, %s37
    %p46 = scmp.eq.s32.totalorder %s15, 1
    %p47 = por %p45, %p46
    %p48 = scmp.ne.s32.totalorder %s37, %s38
    %p49 = scmp.eq.s32.totalorder %s15, 0
    %p50 = por %p48, %p49
    %p51 = scmp.ne.s32.totalorder %s37, %s38
    %p52 = scmp.eq.s32.totalorder %s16, 1
    %p53 = por %p51, %p52
    %p55 = scmp.ne.s32.totalorder %s38, %s54
    %p56 = scmp.eq.s32.totalorder %s16, 0
    %p57 = por %p55, %p56
    %s58 = sadd.s32 %s18, 1
    %s59 = sadd.s32 %s25, 1
    %s60 = ssub.s32 %s17, %s29
    %s61 = ssub.s32 %s58, %s59
    %s62 = sor.u32 %s60, %s61
    %p63 = scmp.eq.s32.totalorder %s62, 0
    %s65 = sadd.s32 %s64, 1
    %s66 = scalar_select %p63, %s64, %s65
    %p69 = pneg %p63
    %p70 = scmp.eq.s32.totalorder %s10, 1
    %p71 = por %p69, %p70
    %p72 = scmp.ne.s32.totalorder %s64, %s67
    %p73 = scmp.eq.s32.totalorder %s10, 0
    %p74 = por %p72, %p73
    %p75 = scmp.ne.s32.totalorder %s64, %s67
    %p76 = scmp.eq.s32.totalorder %s15, 1
    %p77 = por %p75, %p76
    %p78 = scmp.ne.s32.totalorder %s67, %s68
    %p79 = scmp.eq.s32.totalorder %s15, 0
    %p80 = por %p78, %p79
    %p81 = scmp.ne.s32.totalorder %s67, %s68
    %p82 = scmp.eq.s32.totalorder %s16, 1
    %p83 = por %p81, %p82
    %p85 = scmp.ne.s32.totalorder %s68, %s84
    %p86 = scmp.eq.s32.totalorder %s16, 0
    %p87 = por %p85, %p86
    %s89 = sadd.s32 %s88, 1
    %p92 = scmp.eq.s32.totalorder %s10, 1
    %p93 = scmp.ne.s32.totalorder %s88, %s90
    %p94 = scmp.eq.s32.totalorder %s10, 0
    %p95 = por %p93, %p94
    %p96 = scmp.ne.s32.totalorder %s88, %s90
    %p97 = scmp.eq.s32.totalorder %s15, 1
    %p98 = por %p96, %p97
    %p99 = scmp.ne.s32.totalorder %s90, %s91
    %p100 = scmp.eq.s32.totalorder %s15, 0
    %p101 = por %p99, %p100
    %p102 = scmp.ne.s32.totalorder %s90, %s91
    %p103 = scmp.eq.s32.totalorder %s16, 1
    %p104 = por %p102, %p103
    %p106 = scmp.ne.s32.totalorder %s91, %s105
    %p107 = scmp.eq.s32.totalorder %s16, 0
    %p108 = por %p106, %p107
    %s110 = sadd.s32 %s109, 1
    %p113 = scmp.eq.s32.totalorder %s10, 1
    %p114 = scmp.ne.s32.totalorder %s109, %s111
    %p115 = scmp.eq.s32.totalorder %s10, 0
    %p116 = por %p114, %p115
    %p117 = scmp.ne.s32.totalorder %s109, %s111
    %p118 = scmp.eq.s32.totalorder %s15, 1
    %p119 = por %p117, %p118
    %p120 = scmp.ne.s32.totalorder %s111, %s112
    %p121 = scmp.eq.s32.totalorder %s15, 0
    %p122 = por %p120, %p121
    %p123 = scmp.ne.s32.totalorder %s111, %s112
    %p124 = scmp.eq.s32.totalorder %s16, 1
    %p125 = por %p123, %p124
    %p127 = scmp.ne.s32.totalorder %s112, %s126
    %p128 = scmp.eq.s32.totalorder %s16, 0
    %p129 = por %p127, %p128
    %s130 = ssub.s32 %s17, %s29
    %s131 = ssub.s32 %s18, %s25
    %s132 = sor.u32 %s130, %s131
    %p133 = scmp.eq.s32.totalorder %s132, 0
    %s135 = sadd.s32 %s134, 1
    %s136 = scalar_select %p133, %s134, %s135
    %p139 = pneg %p133
    %p140 = scmp.eq.s32.totalorder %s10, 1
    %p141 = por %p139, %p140
    %p142 = scmp.ne.s32.totalorder %s134, %s137
    %p143 = scmp.eq.s32.totalorder %s10, 0
    %p144 = por %p142, %p143
    %p145 = scmp.ne.s32.totalorder %s134, %s137
    %p146 = scmp.eq.s32.totalorder %s15, 1
    %p147 = por %p145, %p146
    %p148 = scmp.ne.s32.totalorder %s137, %s138
    %p149 = scmp.eq.s32.totalorder %s15, 0
    %p150 = por %p148, %p149
    %p151 = scmp.ne.s32.totalorder %s137, %s138
    %p152 = scmp.eq.s32.totalorder %s16, 1
    %p153 = por %p151, %p152
    %p155 = scmp.ne.s32.totalorder %s138, %s154
    %p156 = scmp.eq.s32.totalorder %s16, 0
    %p157 = por %p155, %p156
    %p158 = scmp.le.s32.totalorder 1, %s10
    %p159 = scmp.lt.s32.totalorder %s10, 3
    %p160 = pnand %p158, %p159
    %p161 = pneg %p160
    // Predicated region
    $region9: #{decbr2d_forward.3} parent=5 // pred_check
      _
    $region10: #{decbr2d_forward.3} parent=5 // pred_check_branch
      %163 = sbr.rel (%p160) target = $region12
    $region11: #{decbr2d_forward.3} parent=5 // pred_region
      %s164 = ssub.s32 %s10, 1
      // Predicated region
      $region13: #{decbr2d_forward.3} parent=11 // pred_check
        %p165 = pneg %p101
      $region14: #{decbr2d_forward.3} parent=11 // pred_check_branch
        %167 = sbr.rel (%p165) target = $region16
      $region15: #{decbr2d_forward.3} parent=11 // pred_region
        _
      $region16: #{decbr2d_forward.3} parent=11 // pred_fallthru
        _
      // Predicated region
      $region17: #{decbr2d_forward.3} parent=11 // pred_check
        %p168 = pneg %p122
      $region18: #{decbr2d_forward.3} parent=11 // pred_check_branch
        %170 = sbr.rel (%p168) target = $region20
      $region19: #{decbr2d_forward.3} parent=11 // pred_region
        _
      $region20: #{decbr2d_forward.3} parent=11 // pred_fallthru
        _
    $region12: #{decbr2d_forward.3} parent=5 // pred_fallthru
      _
    %p171 = scmp.lt.s32.totalorder %s10, 2
    // Predicated region
    $region21: #{decbr2d_forward.3} parent=5 // pred_check
      %p172 = pneg %p171
    $region22: #{decbr2d_forward.3} parent=5 // pred_check_branch
      %174 = sbr.rel (%p172) target = $region24
    $region23: #{decbr2d_forward.3} parent=5 // pred_region
      // Predicated region
      $region25: #{decbr2d_forward.3} parent=23 // pred_check
        %p175 = pneg %p44
      $region26: #{decbr2d_forward.3} parent=23 // pred_check_branch
        %177 = sbr.rel (%p175) target = $region28
      $region27: #{decbr2d_forward.3} parent=23 // pred_region
        %s178 = smul.u32 2, %s18
        %p179 = scmp.lt.s32.totalorder %s17, 1
        %s180 = scalar_select %p179, %s17, 1
        %p181 = scmp.lt.s32.totalorder %s178, 3
        %s182 = scalar_select %p181, %s178, 3
        %s183 = smul.addr %s180, 4
        %s184 = sadd.s32 %s182, %s183
        %s185 = smul.addr %s184, 2
        %s186 = scalar_lea.vmem %s0, %s185
        %s187 = smul.u32 2, %s18
      $region28: #{decbr2d_forward.3} parent=23 // pred_fallthru
        _
      // Predicated region
      $region29: #{decbr2d_forward.3} parent=23 // pred_check
        %p188 = pneg %p74
      $region30: #{decbr2d_forward.3} parent=23 // pred_check_branch
        %190 = sbr.rel (%p188) target = $region32
      $region31: #{decbr2d_forward.3} parent=23 // pred_region
        %s191 = sadd.s32 %s18, 1
        %s192 = smul.u32 2, %s191
        %p193 = scmp.lt.s32.totalorder %s17, 1
        %s194 = scalar_select %p193, %s17, 1
        %p195 = scmp.lt.s32.totalorder %s192, 3
        %s196 = scalar_select %p195, %s192, 3
        %s197 = smul.addr %s194, 4
        %s198 = sadd.s32 %s196, %s197
        %s199 = smul.addr %s198, 2
        %s200 = scalar_lea.vmem %s1, %s199
        %s201 = sadd.s32 %s18, 1
        %s202 = smul.u32 2, %s201
      $region32: #{decbr2d_forward.3} parent=23 // pred_fallthru
        _
    $region24: #{decbr2d_forward.3} parent=5 // pred_fallthru
      _
    %p203 = scmp.le.s32.totalorder 1, %s10
    %p204 = scmp.lt.s32.totalorder %s10, 3
    %p205 = pnand %p203, %p204
    %p206 = pneg %p205
    // Predicated region
    $region33: #{decbr2d_forward.3} parent=5 // pred_check
      _
    $region34: #{decbr2d_forward.3} parent=5 // pred_check_branch
      %208 = sbr.rel (%p205) target = $region36
    $region35: #{decbr2d_forward.3} parent=5 // pred_region
      %s209 = ssub.s32 %s10, 1
      %s210 = smul.u32 2, %s20
      %p211 = scmp.lt.s32.totalorder %s19, 1
      %s212 = scalar_select %p211, %s19, 1
      %p213 = scmp.lt.s32.totalorder %s210, 3
      %s214 = scalar_select %p213, %s210, 3
      %s215 = smul.addr %s212, 4
      %s216 = sadd.s32 %s214, %s215
      %s217 = smul.addr %s216, 2
      %s218 = scalar_lea.vmem %s0, %s217
      %p219 = pneg %p50
      %p220 = pneg %p47
      %s221 = sadd.s32 %s20, 1
      %s222 = smul.u32 2, %s221
      %p223 = scmp.lt.s32.totalorder %s19, 1
      %s224 = scalar_select %p223, %s19, 1
      %p225 = scmp.lt.s32.totalorder %s222, 3
      %s226 = scalar_select %p225, %s222, 3
      %s227 = smul.addr %s224, 4
      %s228 = sadd.s32 %s226, %s227
      %s229 = smul.addr %s228, 2
      %s230 = scalar_lea.vmem %s1, %s229
      %p231 = pneg %p80
      %p232 = pneg %p77
      %p233 = pneg %p101
      %p234 = pneg %p98
      %p235 = pneg %p122
      %p236 = pneg %p119
      %p237 = pneg %p150
      %p238 = pneg %p147
      %s239 = smul.u32 2, %s20
      %p240 = scmp.lt.s32.totalorder %s19, 1
      %s241 = scalar_select %p240, %s19, 1
      %p242 = scmp.lt.s32.totalorder %s239, 1
      %s243 = scalar_select %p242, %s239, 1
      %s244 = smul.addr %s241, 8
      %s245 = sadd.s32 %s243, %s244
      %s246 = smul.addr %s245, 4
      %s247 = scalar_lea.vmem %s4, %s246
      %s248 = smul.u32 2, %s20
      %p249 = scmp.lt.s32.totalorder %s19, 1
      %s250 = scalar_select %p249, %s19, 1
      %p251 = scmp.lt.s32.totalorder %s248, 3
      %s252 = scalar_select %p251, %s248, 3
      %s253 = smul.addr %s250, 4
      %s254 = sadd.s32 %s252, %s253
      %s255 = smul.addr %s254, 2
      %s256 = scalar_lea.vmem %s0, %s255
      %s257 = smul.u32 2, %s20
      %s258 = sadd.s32 %s20, 1
      %s259 = smul.u32 2, %s258
      %p260 = scmp.lt.s32.totalorder %s19, 1
      %s261 = scalar_select %p260, %s19, 1
      %p262 = scmp.lt.s32.totalorder %s259, 3
      %s263 = scalar_select %p262, %s259, 3
      %s264 = smul.addr %s261, 4
      %s265 = sadd.s32 %s263, %s264
      %s266 = smul.addr %s265, 2
      %s267 = scalar_lea.vmem %s1, %s266
      %s268 = sadd.s32 %s20, 1
      %s269 = smul.u32 2, %s268
      %s270 = smul.u32 2, %s20
      %p271 = scmp.lt.s32.totalorder %s19, 1
      %s272 = scalar_select %p271, %s19, 1
      %p273 = scmp.lt.s32.totalorder %s270, 1
      %s274 = scalar_select %p273, %s270, 1
      %s275 = smul.addr %s272, 8
      %s276 = sadd.s32 %s274, %s275
      %s277 = smul.addr %s276, 4
      %s278 = scalar_lea.vmem %s4, %s277
      %s279 = smul.u32 2, %s20
      %v283 = vld [vmem:[%s256] sm:$0xf]
      %v284 = vld [vmem:[%s267] sm:$0xf]
      %286 = vst [vmem:[#allocation1] ss:$4 sm:$0xff] %v283
      %v287 = vld.sshfl [vmem:[#allocation1] sm:$0xff pattern:$0x73625140]
      %v289 = vld.sshfl [vmem:[#allocation1 + $0x8] sm:$0xff pattern:$0x73625140]
      %294 = vst [vmem:[#allocation1] ss:$4 sm:$0xff] %v284
      %v295 = vld.sshfl [vmem:[#allocation1] sm:$0xff pattern:$0x73625140]
      %v298 = vlaneseq
      %v299 = vand.u32 %v298, 127
      %v300 = vadd.s32 %v299, 128
      %s301 = smul.u32 %s20, 256
      %v302 = vstv %s301
      %v303 = vadd.s32 %v299, %v302
      %v304 = vadd.s32 %v300, %v302
      %v305 = vand.u32 %v303, 15
      %v306 = vand.u32 %v304, 15
      %vm307 = vcmp.ne.s32.totalorder %v305, 15
      %vm308 = vcmp.ne.s32.totalorder %v306, 15
      %v309 = vsel %vm307, 1, 0
      %v310 = vsel %vm308, 1, 0
      %vm311 = vcmp.eq.s32.totalorder %v309, 1
      %vm312 = vcmp.eq.s32.totalorder %v310, 1
      %vm313 = vmpackc.low %vm312, %vm311
      %v314 = vsel %vm313, 65537, 0
      %v315 = vperm.slane %v314, 0
      %v316 = vperm.slane %v314, 4
      %317 = vrot.lane.b32.xlu0 %v315, 1
      %v318 = vpop.permute.xlu0 %317
      %319 = vrot.lane.b32.xlu0 %v316, 1
      %v320 = vpop.permute.xlu0 %319
      %vm321 = vcmask 7168
      %v322 = vsel %vm321, %v318, %v320
      %v323 = vunpack.c.l.b16 %v318
      %v324 = vunpack.c.h.b16 %v318
      %v325 = vunpack.c.l.b16 0
      %v326 = vunpack.c.h.b16 0
      %vm327 = vcmp.ne.s32.totalorder %v323, %v325
      %vm328 = vcmp.ne.s32.totalorder %v324, %v326
      %vm329 = vmpackc.low %vm328, %vm327
      %v330 = vunpack.c.l.b16 %v322
      %v331 = vunpack.c.h.b16 %v322
      %v332 = vunpack.c.l.b16 0
      %v333 = vunpack.c.h.b16 0
      %vm334 = vcmp.ne.s32.totalorder %v330, %v332
      %vm335 = vcmp.ne.s32.totalorder %v331, %v333
      %vm336 = vmpackc.low %vm335, %vm334
      %v337 = vunpack.c.l.b16 %v320
      %v338 = vunpack.c.h.b16 %v320
      %v339 = vunpack.c.l.b16 0
      %v340 = vunpack.c.h.b16 0
      %vm341 = vcmp.ne.s32.totalorder %v337, %v339
      %vm342 = vcmp.ne.s32.totalorder %v338, %v340
      %vm343 = vmpackc.low %vm342, %vm341
      %v344 = vsel %vm329, %v287, 0
      %v345 = vsel %vm336, %v289, 0
      %v346 = vsel %vm343, %v295, 0
      %347 = vrot.lane.b32.xlu0 %v315, 17
      %v348 = vpop.permute.xlu0 %347
      %349 = vrot.lane.b32.xlu0 %v316, 17
      %v350 = vpop.permute.xlu0 %349
      %vm351 = vcmask 138240
      %v352 = vsel %vm351, %v348, %v350
      %v353 = vunpack.c.l.b16 %v348
      %v354 = vunpack.c.h.b16 %v348
      %v355 = vunpack.c.l.b16 0
      %v356 = vunpack.c.h.b16 0
      %vm357 = vcmp.ne.s32.totalorder %v353, %v355
      %vm358 = vcmp.ne.s32.totalorder %v354, %v356
      %vm359 = vmpackc.low %vm358, %vm357
      %v360 = vunpack.c.l.b16 %v352
      %v361 = vunpack.c.h.b16 %v352
      %v362 = vunpack.c.l.b16 0
      %v363 = vunpack.c.h.b16 0
      %vm364 = vcmp.ne.s32.totalorder %v360, %v362
      %vm365 = vcmp.ne.s32.totalorder %v361, %v363
      %vm366 = vmpackc.low %vm365, %vm364
      %v367 = vunpack.c.l.b16 %v350
      %v368 = vunpack.c.h.b16 %v350
      %v369 = vunpack.c.l.b16 0
      %v370 = vunpack.c.h.b16 0
      %vm371 = vcmp.ne.s32.totalorder %v367, %v369
      %vm372 = vcmp.ne.s32.totalorder %v368, %v370
      %vm373 = vmpackc.low %vm372, %vm371
      %v374 = vsel %vm359, %v287, 0
      %v375 = vsel %vm366, %v289, 0
      %v376 = vsel %vm373, %v295, 0
      %v377 = vld [vmem:[%s2] sm:$0xf]
      %v378 = vld [vmem:[%s2 + $0x4] sm:$0xf]
      %v379 = vld [vmem:[%s2 + $0x8] sm:$0xf]
      %v380 = vld [vmem:[%s2 + $0xc] sm:$0xf]
      %s381 = scalar_lea.vmem %s2, 16
      %v382 = vld [vmem:[%s381] sm:$0xf]
      %v383 = vld [vmem:[%s381 + $0x4] sm:$0xf]
      %v384 = vld [vmem:[%s381 + $0x8] sm:$0xf]
      %v385 = vld [vmem:[%s381 + $0xc] sm:$0xf]
      %v390 = vunpack.c.l.b16 %v382
      %v391 = vunpack.c.l.b16 %v383
      %v392 = vunpack.c.l.b16 %v384
      %v393 = vunpack.c.l.b16 %v385
      %v394 = vpack.c.b16 %v391, %v390
      %v395 = vpack.c.b16 %v393, %v392
      %399 = vrot.lane.b32.xlu0 %v344, 127
      %v400 = vpop.permute.xlu0 %399
      %401 = vrot.lane.b32.xlu0 %v345, 127
      %v402 = vpop.permute.xlu0 %401
      %403 = vrot.lane.b32.xlu0 %v346, 127
      %v404 = vpop.permute.xlu0 %403
      %vm405 = vcmask 1039360
      %v406 = vsel %vm405, %v400, %v402
      %v407 = vsel %vm405, %v402, %v404
      %vm408 = vcmask 31744
      %v410 = vsel %vm408, %v394, 0
      %v413 = vsel %vm408, %v395, 0
      %vm415 = vcmask 1041408
      %v417 = vsel %vm415, %v406, 0
      %v420 = vsel %vm415, %v407, 0
      %422 = vmatpush.bf16.msra.mxu0 0
      %423 = vmatpush.bf16.msra.mxu0 0
      %424 = vmatpush.bf16.msra.mxu0 0
      %425 = vmatpush.bf16.msra.mxu0 0
      %426 = vmatpush.bf16.msra.mxu0 0
      %427 = vmatpush.bf16.msra.mxu0 0
      %428 = vmatpush.bf16.msra.mxu0 0
      %429 = vmatpush.bf16.msra.mxu0 %v417
      %430 = vmatmul.bf16.gmra.mxu0 %v410
      %v431 = vpop.f32.mrf.mxu0
      %v432 = vadd.f32 0.0, %v431
      %v433 = vpop.f32.mrf.mxu0
      %v434 = vadd.f32 0.0, %v433
      %435 = vmatmul.bf16.gmra.mxu0 %v413
      %v436 = vpop.f32.mrf.mxu0
      %v437 = vadd.f32 0.0, %v436
      %v438 = vpop.f32.mrf.mxu0
      %v439 = vadd.f32 0.0, %v438
      %440 = vdwg.mxu0
      %441 = vmatpush.bf16.msra.mxu0 0
      %442 = vmatpush.bf16.msra.mxu0 0
      %443 = vmatpush.bf16.msra.mxu0 0
      %444 = vmatpush.bf16.msra.mxu0 0
      %445 = vmatpush.bf16.msra.mxu0 0
      %446 = vmatpush.bf16.msra.mxu0 0
      %447 = vmatpush.bf16.msra.mxu0 0
      %448 = vmatpush.bf16.msra.mxu0 %v420
      %449 = vmatmul.bf16.gmra.mxu0 %v410
      %v450 = vpop.f32.mrf.mxu0
      %v451 = vadd.f32 0.0, %v450
      %v452 = vpop.f32.mrf.mxu0
      %v453 = vadd.f32 0.0, %v452
      %454 = vmatmul.bf16.gmra.mxu0 %v413
      %v455 = vpop.f32.mrf.mxu0
      %v456 = vadd.f32 0.0, %v455
      %v457 = vpop.f32.mrf.mxu0
      %v458 = vadd.f32 0.0, %v457
      %459 = vdwg.mxu0
      %v464 = vunpack.c.l.b16 %v377
      %v465 = vunpack.c.l.b16 %v378
      %v466 = vunpack.c.l.b16 %v379
      %v467 = vunpack.c.l.b16 %v380
      %v468 = vpack.c.b16 %v465, %v464
      %v469 = vpack.c.b16 %v467, %v466
      %470 = vst [vmem:[#allocation1] ss:$4 sm:$0xff] %v283
      %v471 = vld.sshfl [vmem:[#allocation1] sm:$0xff pattern:$0x73625140]
      %v472 = vld.sshfl [vmem:[#allocation1 + $0x8] sm:$0xff pattern:$0x73625140]
      %v474 = vsel %vm408, %v468, 0
      %v477 = vsel %vm408, %v469, 0
      %v479 = vsel %vm415, %v471, 0
      %v481 = vsel %vm415, %v472, 0
      %483 = vmatpush.bf16.msra.mxu0 0
      %484 = vmatpush.bf16.msra.mxu0 0
      %485 = vmatpush.bf16.msra.mxu0 0
      %486 = vmatpush.bf16.msra.mxu0 0
      %487 = vmatpush.bf16.msra.mxu0 0
      %488 = vmatpush.bf16.msra.mxu0 0
      %489 = vmatpush.bf16.msra.mxu0 0
      %490 = vmatpush.bf16.msra.mxu0 %v479
      %491 = vmatmul.bf16.gmra.mxu0 %v474
      %v492 = vpop.f32.mrf.mxu0
      %v493 = vadd.f32 %v432, %v492
      %v494 = vpop.f32.mrf.mxu0
      %v495 = vadd.f32 %v434, %v494
      %496 = vmatmul.bf16.gmra.mxu0 %v477
      %v497 = vpop.f32.mrf.mxu0
      %v498 = vadd.f32 %v437, %v497
      %v499 = vpop.f32.mrf.mxu0
      %v500 = vadd.f32 %v439, %v499
      %501 = vdwg.mxu0
      %502 = vmatpush.bf16.msra.mxu0 0
      %503 = vmatpush.bf16.msra.mxu0 0
      %504 = vmatpush.bf16.msra.mxu0 0
      %505 = vmatpush.bf16.msra.mxu0 0
      %506 = vmatpush.bf16.msra.mxu0 0
      %507 = vmatpush.bf16.msra.mxu0 0
      %508 = vmatpush.bf16.msra.mxu0 0
      %509 = vmatpush.bf16.msra.mxu0 %v481
      %510 = vmatmul.bf16.gmra.mxu0 %v474
      %v511 = vpop.f32.mrf.mxu0
      %v512 = vadd.f32 %v451, %v511
      %v513 = vpop.f32.mrf.mxu0
      %v514 = vadd.f32 %v453, %v513
      %515 = vmatmul.bf16.gmra.mxu0 %v477
      %v516 = vpop.f32.mrf.mxu0
      %v517 = vadd.f32 %v456, %v516
      %v518 = vpop.f32.mrf.mxu0
      %v519 = vadd.f32 %v458, %v518
      %520 = vdwg.mxu0
      %s521 = scalar_lea.vmem %s2, 32
      %v522 = vld [vmem:[%s521] sm:$0xf]
      %v523 = vld [vmem:[%s521 + $0x4] sm:$0xf]
      %v524 = vld [vmem:[%s521 + $0x8] sm:$0xf]
      %v525 = vld [vmem:[%s521 + $0xc] sm:$0xf]
      %v530 = vunpack.c.l.b16 %v522
      %v531 = vunpack.c.l.b16 %v523
      %v532 = vunpack.c.l.b16 %v524
      %v533 = vunpack.c.l.b16 %v525
      %v534 = vpack.c.b16 %v531, %v530
      %v535 = vpack.c.b16 %v533, %v532
      %536 = vrot.lane.b32.xlu0 %v287, 112
      %v537 = vpop.permute.xlu0 %536
      %538 = vrot.lane.b32.xlu0 %v289, 112
      %v539 = vpop.permute.xlu0 %538
      %540 = vrot.lane.b32.xlu0 %v295, 112
      %v541 = vpop.permute.xlu0 %540
      %vm542 = vcmask 916480
      %v543 = vsel %vm542, %v537, %v539
      %v544 = vsel %vm542, %v539, %v541
      %v546 = vsel %vm408, %v534, 0
      %v549 = vsel %vm408, %v535, 0
      %v552 = vsel %vm415, %v543, 0
      %v555 = vsel %vm415, %v544, 0
      %557 = vmatpush.bf16.msra.mxu0 0
      %558 = vmatpush.bf16.msra.mxu0 0
      %559 = vmatpush.bf16.msra.mxu0 0
      %560 = vmatpush.bf16.msra.mxu0 0
      %561 = vmatpush.bf16.msra.mxu0 0
      %562 = vmatpush.bf16.msra.mxu0 0
      %563 = vmatpush.bf16.msra.mxu0 0
      %564 = vmatpush.bf16.msra.mxu0 %v552
      %565 = vmatmul.bf16.gmra.mxu0 %v546
      %v566 = vpop.f32.mrf.mxu0
      %v567 = vadd.f32 0.0, %v566
      %v568 = vpop.f32.mrf.mxu0
      %v569 = vadd.f32 0.0, %v568
      %570 = vmatmul.bf16.gmra.mxu0 %v549
      %v571 = vpop.f32.mrf.mxu0
      %v572 = vadd.f32 0.0, %v571
      %v573 = vpop.f32.mrf.mxu0
      %v574 = vadd.f32 0.0, %v573
      %575 = vdwg.mxu0
      %576 = vmatpush.bf16.msra.mxu0 0
      %577 = vmatpush.bf16.msra.mxu0 0
      %578 = vmatpush.bf16.msra.mxu0 0
      %579 = vmatpush.bf16.msra.mxu0 0
      %580 = vmatpush.bf16.msra.mxu0 0
      %581 = vmatpush.bf16.msra.mxu0 0
      %582 = vmatpush.bf16.msra.mxu0 0
      %583 = vmatpush.bf16.msra.mxu0 %v555
      %584 = vmatmul.bf16.gmra.mxu0 %v546
      %v585 = vpop.f32.mrf.mxu0
      %v586 = vadd.f32 0.0, %v585
      %v587 = vpop.f32.mrf.mxu0
      %v588 = vadd.f32 0.0, %v587
      %589 = vmatmul.bf16.gmra.mxu0 %v549
      %v590 = vpop.f32.mrf.mxu0
      %v591 = vadd.f32 0.0, %v590
      %v592 = vpop.f32.mrf.mxu0
      %v593 = vadd.f32 0.0, %v592
      %594 = vdwg.mxu0
      %v595 = vadd.f32 %v493, %v567
      %v596 = vadd.f32 %v512, %v586
      %v597 = vadd.f32 %v495, %v569
      %v598 = vadd.f32 %v514, %v588
      %v599 = vadd.f32 %v498, %v572
      %v600 = vadd.f32 %v517, %v591
      %v601 = vadd.f32 %v500, %v574
      %v602 = vadd.f32 %v519, %v593
      %s603 = scalar_lea.vmem %s2, 48
      %v604 = vld [vmem:[%s603] sm:$0xf]
      %v605 = vld [vmem:[%s603 + $0x4] sm:$0xf]
      %v606 = vld [vmem:[%s603 + $0x8] sm:$0xf]
      %v607 = vld [vmem:[%s603 + $0xc] sm:$0xf]
      %v612 = vunpack.c.l.b16 %v604
      %v613 = vunpack.c.l.b16 %v605
      %v614 = vunpack.c.l.b16 %v606
      %v615 = vunpack.c.l.b16 %v607
      %v616 = vpack.c.b16 %v613, %v612
      %v617 = vpack.c.b16 %v615, %v614
      %621 = vrot.lane.b32.xlu0 %v374, 111
      %v622 = vpop.permute.xlu0 %621
      %623 = vrot.lane.b32.xlu0 %v375, 111
      %v624 = vpop.permute.xlu0 %623
      %625 = vrot.lane.b32.xlu0 %v376, 111
      %v626 = vpop.permute.xlu0 %625
      %vm627 = vcmask 908288
      %v628 = vsel %vm627, %v622, %v624
      %v629 = vsel %vm627, %v624, %v626
      %v631 = vsel %vm408, %v616, 0
      %v634 = vsel %vm408, %v617, 0
      %v637 = vsel %vm415, %v628, 0
      %v640 = vsel %vm415, %v629, 0
      %642 = vmatpush.bf16.msra.mxu0 0
      %643 = vmatpush.bf16.msra.mxu0 0
      %644 = vmatpush.bf16.msra.mxu0 0
      %645 = vmatpush.bf16.msra.mxu0 0
      %646 = vmatpush.bf16.msra.mxu0 0
      %647 = vmatpush.bf16.msra.mxu0 0
      %648 = vmatpush.bf16.msra.mxu0 0
      %649 = vmatpush.bf16.msra.mxu0 %v637
      %650 = vmatmul.bf16.gmra.mxu0 %v631
      %v651 = vpop.f32.mrf.mxu0
      %v652 = vadd.f32 0.0, %v651
      %v653 = vpop.f32.mrf.mxu0
      %v654 = vadd.f32 0.0, %v653
      %655 = vmatmul.bf16.gmra.mxu0 %v634
      %v656 = vpop.f32.mrf.mxu0
      %v657 = vadd.f32 0.0, %v656
      %v658 = vpop.f32.mrf.mxu0
      %v659 = vadd.f32 0.0, %v658
      %660 = vdwg.mxu0
      %661 = vmatpush.bf16.msra.mxu0 0
      %662 = vmatpush.bf16.msra.mxu0 0
      %663 = vmatpush.bf16.msra.mxu0 0
      %664 = vmatpush.bf16.msra.mxu0 0
      %665 = vmatpush.bf16.msra.mxu0 0
      %666 = vmatpush.bf16.msra.mxu0 0
      %667 = vmatpush.bf16.msra.mxu0 0
      %668 = vmatpush.bf16.msra.mxu0 %v640
      %669 = vmatmul.bf16.gmra.mxu0 %v631
      %v670 = vpop.f32.mrf.mxu0
      %v671 = vadd.f32 0.0, %v670
      %v672 = vpop.f32.mrf.mxu0
      %v673 = vadd.f32 0.0, %v672
      %674 = vmatmul.bf16.gmra.mxu0 %v634
      %v675 = vpop.f32.mrf.mxu0
      %v676 = vadd.f32 0.0, %v675
      %v677 = vpop.f32.mrf.mxu0
      %v678 = vadd.f32 0.0, %v677
      %679 = vdwg.mxu0
      %v680 = vadd.f32 %v595, %v652
      %v681 = vadd.f32 %v596, %v671
      %v682 = vadd.f32 %v597, %v654
      %v683 = vadd.f32 %v598, %v673
      %v684 = vadd.f32 %v599, %v657
      %v685 = vadd.f32 %v600, %v676
      %v686 = vadd.f32 %v601, %v659
      %v687 = vadd.f32 %v602, %v678
      %v688 = vld [vmem:[%s3] sm:$0xff]
      %v689 = vld [vmem:[%s3 + $0x8] sm:$0xff]
      %v690 = vld [vmem:[%s3 + $0x10] sm:$0xff]
      %v691 = vld [vmem:[%s3 + $0x18] sm:$0xff]
      %693 = vset.pattern.permute.xlu0 0
      %694 = vperm.xlu0 %693, %v688
      %v695 = vpop.permute.xlu0 %694
      %698 = vset.pattern.permute.xlu0 0
      %699 = vperm.xlu0 %698, %v689
      %v700 = vpop.permute.xlu0 %699
      %703 = vset.pattern.permute.xlu0 0
      %704 = vperm.xlu0 %703, %v690
      %v705 = vpop.permute.xlu0 %704
      %708 = vset.pattern.permute.xlu0 0
      %709 = vperm.xlu0 %708, %v691
      %v710 = vpop.permute.xlu0 %709
      %v712 = vmul.f32 %v680, %v695
      %v713 = vmul.f32 %v681, %v695
      %v714 = vmul.f32 %v682, %v700
      %v715 = vmul.f32 %v683, %v700
      %v716 = vmul.f32 %v684, %v705
      %v717 = vmul.f32 %v685, %v705
      %v718 = vmul.f32 %v686, %v710
      %v719 = vmul.f32 %v687, %v710
      %s720 = scalar_lea.vmem %s3, 32
      %v721 = vld [vmem:[%s720] sm:$0xff]
      %v722 = vld [vmem:[%s720 + $0x8] sm:$0xff]
      %v723 = vld [vmem:[%s720 + $0x10] sm:$0xff]
      %v724 = vld [vmem:[%s720 + $0x18] sm:$0xff]
      %726 = vset.pattern.permute.xlu0 0
      %727 = vperm.xlu0 %726, %v721
      %v728 = vpop.permute.xlu0 %727
      %731 = vset.pattern.permute.xlu0 0
      %732 = vperm.xlu0 %731, %v722
      %v733 = vpop.permute.xlu0 %732
      %736 = vset.pattern.permute.xlu0 0
      %737 = vperm.xlu0 %736, %v723
      %v738 = vpop.permute.xlu0 %737
      %741 = vset.pattern.permute.xlu0 0
      %742 = vperm.xlu0 %741, %v724
      %v743 = vpop.permute.xlu0 %742
      %v745 = vadd.f32 %v712, %v728
      %v746 = vadd.f32 %v713, %v728
      %v747 = vadd.f32 %v714, %v733
      %v748 = vadd.f32 %v715, %v733
      %v749 = vadd.f32 %v716, %v738
      %v750 = vadd.f32 %v717, %v738
      %v751 = vadd.f32 %v718, %v743
      %v752 = vadd.f32 %v719, %v743
      %v753 = vmax.f32 %v745, 0.0
      %v754 = vmax.f32 %v746, 0.0
      %v755 = vmax.f32 %v747, 0.0
      %v756 = vmax.f32 %v748, 0.0
      %v757 = vmax.f32 %v749, 0.0
      %v758 = vmax.f32 %v750, 0.0
      %v759 = vmax.f32 %v751, 0.0
      %v760 = vmax.f32 %v752, 0.0
      %v761 = vpack.c.bf16 %v754, %v753
      %v762 = vpack.c.bf16 %v756, %v755
      %v763 = vpack.c.bf16 %v758, %v757
      %v764 = vpack.c.bf16 %v760, %v759
      %765 = vst [vmem:[%s278] sm:$0xff] %v761
      %766 = vst [vmem:[%s278 + $0x8] sm:$0xff] %v762
      %767 = vst [vmem:[%s278 + $0x10] sm:$0xff] %v763
      %768 = vst [vmem:[%s278 + $0x18] sm:$0xff] %v764
      %s769 = smul.u32 2, %s20
      %p770 = scmp.lt.s32.totalorder %s19, 1
      %s771 = scalar_select %p770, %s19, 1
      %p772 = scmp.lt.s32.totalorder %s769, 1
      %s773 = scalar_select %p772, %s769, 1
      %s774 = smul.addr %s771, 8
      %s775 = sadd.s32 %s773, %s774
      %s776 = smul.addr %s775, 4
      %s777 = scalar_lea.vmem %s4, %s776
      // Predicated region
      $region37: #{decbr2d_forward.3} parent=35 // pred_check
        %p778 = pneg %p147
      $region38: #{decbr2d_forward.3} parent=35 // pred_check_branch
        %780 = sbr.rel (%p778) target = $region40
      $region39: #{decbr2d_forward.3} parent=35 // pred_region
        %s781 = smul.u32 2, %s20
      $region40: #{decbr2d_forward.3} parent=35 // pred_fallthru
        _
    $region36: #{decbr2d_forward.3} parent=5 // pred_fallthru
      _
    %p782 = scmp.le.s32.totalorder 2, %s10
    // Predicated region
    $region41: #{decbr2d_forward.3} parent=5 // pred_check
      %p783 = pneg %p782
    $region42: #{decbr2d_forward.3} parent=5 // pred_check_branch
      %785 = sbr.rel (%p783) target = $region44
    $region43: #{decbr2d_forward.3} parent=5 // pred_region
      %s786 = ssub.s32 %s10, 2
      // Predicated region
      $region45: #{decbr2d_forward.3} parent=43 // pred_check
        %p787 = pneg %p153
      $region46: #{decbr2d_forward.3} parent=43 // pred_check_branch
        %789 = sbr.rel (%p787) target = $region48
      $region47: #{decbr2d_forward.3} parent=43 // pred_region
        %s790 = smul.u32 2, %s22
        %p791 = scmp.lt.s32.totalorder %s21, 1
        %s792 = scalar_select %p791, %s21, 1
        %p793 = scmp.lt.s32.totalorder %s790, 1
        %s794 = scalar_select %p793, %s790, 1
        %s795 = smul.addr %s792, 8
        %s796 = sadd.s32 %s794, %s795
        %s797 = smul.addr %s796, 4
        %s798 = scalar_lea.vmem %s4, %s797
      $region48: #{decbr2d_forward.3} parent=43 // pred_fallthru
        _
    $region44: #{decbr2d_forward.3} parent=5 // pred_fallthru
      _
  $region6: #{decbr2d_forward.3} parent=0 // loop_footer
    %s14 = sadd.s32 1, %s10
  $region7: #{decbr2d_forward.3} parent=0 // loop_footer_branch
    %9 = sbr.rel target = $region3
  $region8: #{decbr2d_forward.3} parent=0 // loop_exit
    _

</llo_original>
